<compile_context>
chip_gen: v6e
topology: v6e:2x2x1
jax: 0.10.0
libtpu: 0.0.40
codegen_flags: <defaults>
</compile_context>

<pallas_src>
import numpy as np
import jax
import jax.numpy as jnp
from jax import lax
from jax.experimental import pallas as pl
from jax.experimental.pallas import tpu as pltpu

N_EMBD = 32
NB_HEAD = 4
HEAD_DIM = N_EMBD // NB_HEAD
N_NODES = 16
N_EDGES = 8


# ----------------------------------------------------------------------------
# Single fused kernel: QKV projections + gather + all-head attention +
# scatter-sum + output projections.
# ----------------------------------------------------------------------------
def _fused_kernel(nodes_ref, edges_ref, src_col_ref, dst_col_ref, dst_row_ref,
                  wn_ref, we_ref, bqkv_ref,
                  wpn_ref, bpn_ref, wpe_ref, bpe_ref,
                  nodes_out_ref, edges_out_ref):
    f32 = jnp.float32
    N, D = nodes_ref.shape
    E = edges_ref.shape[0]
    H = NB_HEAD
    hd = D // H
    R = H * E              # rows of the chunk-major "headified" layout
    eph = E // H           # edge-rows of the flat (E, D) tensor per head
    shift = int(np.log2(eph))
    emask = E - 1          # E, eph are powers of two (asserted in wrapper)

    nodes = nodes_ref[...]                                   # (N, D)
    edges = edges_ref[...]                                   # (E, D)

    # ---- one-hot gather / scatter matrices from int32 indices (in-kernel) ----
    n_lane = lax.broadcasted_iota(jnp.int32, (E, N), 1)
    oh_src = (src_col_ref[...] == n_lane).astype(f32)        # (E, N)
    oh_dst = (dst_col_ref[...] == n_lane).astype(f32)        # (E, N)
    n_sub = lax.broadcasted_iota(jnp.int32, (N, E), 0)
    oh_dst_t = (dst_row_ref[...] == n_sub).astype(f32)       # (N, E) scatter mat

    # ---- fused [Q|K|V] projections (lane-dense MXU matmuls) ----
    pn = jnp.dot(nodes, wn_ref[...], preferred_element_type=f32)                 # (N, 3D)
    pe = jnp.dot(edges, we_ref[...], preferred_element_type=f32) + bqkv_ref[...]  # (E, 3D)

    # ---- gather node projections onto edges (one-hot MXU matmuls) ----
    q_nod = jnp.dot(oh_src, pn[:, :D], preferred_element_type=f32)     # (E, D)
    kv_nod = jnp.dot(oh_dst, pn[:, D:], preferred_element_type=f32)    # (E, 2D)

    q2 = q_nod + pe[:, :D]                                   # (E, D)
    k2 = kv_nod[:, :D] + pe[:, D:2 * D]                      # (E, D)
    v2 = kv_nod[:, D:] + pe[:, 2 * D:]                       # (E, D)

    # ---- chunk-major "headified" layout (permutation of torch's flat view):
    #      row s*E + e  <->  x[e, s*hd:(s+1)*hd];  head of that row = e // eph.
    # Placement is done with tiny one-hot matmuls (no tiled-dim reshape).
    r_sub = lax.broadcasted_iota(jnp.int32, (R, E), 0)
    e_lane = lax.broadcasted_iota(jnp.int32, (R, E), 1)
    sel = [(r_sub == (e_lane + s * E)).astype(f32) for s in range(H)]   # (R, E)

    def headify(x):
        acc = jnp.dot(sel[0], x[:, :hd], preferred_element_type=f32)
        for s in range(1, H):
            acc = acc + jnp.dot(sel[s], x[:, s * hd:(s + 1) * hd],
                                preferred_element_type=f32)
        return acc                                           # (R, hd)

    yq = headify(q2)
    yk = headify(k2)
    yv = headify(v2)

    # ---- all heads in one masked softmax (block mask = same head) ----
    ri = lax.broadcasted_iota(jnp.int32, (R, R), 0)
    rj = lax.broadcasted_iota(jnp.int32, (R, R), 1)
    same_head = ((ri & emask) >> shift) == ((rj & emask) >> shift)

    scale = 1.0 / float(np.sqrt(hd))
    s_mat = lax.dot_general(yq, yk, (((1,), (1,)), ((), ())),
                            preferred_element_type=f32) * scale        # (R, R)
    s_mat = jnp.where(same_head, s_mat, -1e30)
    m = jnp.max(s_mat, axis=-1, keepdims=True)
    p = jnp.exp(s_mat - m)
    p = jnp.where(same_head, p, 0.0)
    denom = jnp.sum(p, axis=-1, keepdims=True)
    attn = p * pl.reciprocal(denom, approx=True)             # EUP reciprocal
    o_cm = jnp.dot(attn, yv, preferred_element_type=f32)     # (R, hd)

    # ---- inverse permutation fused into the output projections:
    #      out_edges_flat[:, s*hd:(s+1)*hd] == o_cm[s*E:(s+1)*E, :]
    blk0 = o_cm[0:E, :]
    edges_out = jnp.dot(blk0, wpe_ref[0:hd, :], preferred_element_type=f32)
    t_nodes = jnp.dot(blk0, wpn_ref[0:hd, :], preferred_element_type=f32)
    for s in range(1, H):
        blk = o_cm[s * E:(s + 1) * E, :]                                # (E, hd)
        edges_out = edges_out + jnp.dot(blk, wpe_ref[s * hd:(s + 1) * hd, :],
                                        preferred_element_type=f32)
        t_nodes = t_nodes + jnp.dot(blk, wpn_ref[s * hd:(s + 1) * hd, :],
                                    preferred_element_type=f32)

    edges_out_ref[...] = edges_out + bpe_ref[...]
    # scatter-sum(edge -> node) as a one-hot MXU matmul, then node bias
    nodes_out_ref[...] = jnp.dot(oh_dst_t, t_nodes,
                                 preferred_element_type=f32) + bpn_ref[...]


# ----------------------------------------------------------------------------
# One-time parameter fusion (hoisted out of the per-call hot path)
# ----------------------------------------------------------------------------
def prepare_params(params):
    wn_cat = jnp.concatenate([params["WQ_node"], params["WK_node"],
                              params["WV_node"]], axis=1)              # (D, 3D)
    we_cat = jnp.concatenate([params["WQ_edge"], params["WK_edge"],
                              params["WV_edge"]], axis=1)              # (D, 3D)
    # node bias is picked up exactly once per edge by the one-hot gather,
    # so it can be folded together with the edge bias.
    b_cat = jnp.concatenate([params["bQ_node"] + params["bQ_edge"],
                             params["bK_node"] + params["bK_edge"],
                             params["bV_node"] + params["bV_edge"]], axis=1)  # (1, 3D)
    return dict(wn_cat=wn_cat, we_cat=we_cat, b_cat=b_cat,
                wp_nodes=params["Wp_nodes"], bp_nodes=params["bp_nodes"],
                wp_edges=params["Wp_edges"], bp_edges=params["bp_edges"])


# ----------------------------------------------------------------------------
# Wrapper
# ----------------------------------------------------------------------------
@jax.jit
def multi_head_relational_attention(nodes, edges_index, edges_values, fused):
    N, D = nodes.shape
    E = edges_values.shape[0]
    H = NB_HEAD
    hd = D // H
    assert D % H == 0 and E % H == 0
    eph = E // H
    assert (E & (E - 1)) == 0 and (eph & (eph - 1)) == 0, \
        "kernel assumes power-of-two E and edges-per-head"

    f32 = jnp.float32
    src_col = edges_index[0].astype(jnp.int32)[:, None]      # (E, 1)
    dst_col = edges_index[1].astype(jnp.int32)[:, None]      # (E, 1)
    dst_row = edges_index[1].astype(jnp.int32)[None, :]      # (1, E)

    R = H * E
    flops = 2 * (N * D * 3 * D + E * D * 3 * D + E * N * 3 * D
                 + 3 * H * R * E * hd          # headify placement matmuls
                 + R * R * hd * 2              # scores + attn @ v
                 + H * E * hd * D * 2          # fused output projections
                 + N * E * D)                  # scatter
    bytes_accessed = 4 * (N * D + E * D + 3 * E
                          + 2 * D * 3 * D + 3 * D
                          + 2 * (D * D + D)
                          + N * D + E * D)
    cost = pl.CostEstimate(flops=flops, transcendentals=R * R,
                           bytes_accessed=bytes_accessed)

    vmem = pl.BlockSpec(memory_space=pltpu.MemorySpace.VMEM)
    nodes_out, edges_out = pl.pallas_call(
        _fused_kernel,
        out_shape=[jax.ShapeDtypeStruct((N, D), f32),
                   jax.ShapeDtypeStruct((E, D), f32)],
        in_specs=[vmem] * 12,
        out_specs=[vmem] * 2,
        cost_estimate=cost,
    )(nodes, edges_values, src_col, dst_col, dst_row,
      fused["wn_cat"], fused["we_cat"], fused["b_cat"],
      fused["wp_nodes"], fused["bp_nodes"],
      fused["wp_edges"], fused["bp_edges"])
    return nodes_out, edges_out


# ----------------------------------------------------------------------------
# Pure-JAX reference (mirrors the PyTorch forward) for correctness checking
# ----------------------------------------------------------------------------
def reference_forward(nodes, edges_index, edges_values, params):
    hp = lax.Precision.HIGHEST

    def lin(x, w, b):
        return jnp.dot(x, w, precision=hp) + b

    q_node = lin(nodes, params["WQ_node"], params["bQ_node"])
    k_node = lin(nodes, params["WK_node"], params["bK_node"])
    v_node = lin(nodes, params["WV_node"], params["bV_node"])
    q_edge = lin(edges_values, params["WQ_edge"], params["bQ_edge"])
    k_edge = lin(edges_values, params["WK_edge"], params["bK_edge"])
    v_edge = lin(edges_values, params["WV_edge"], params["bV_edge"])

    E = edges_values.shape[0]
    q_ij = (q_node[edges_index[0]] + q_edge).reshape(NB_HEAD, E, HEAD_DIM)
    k_ij = (k_node[edges_index[1]] + k_edge).reshape(NB_HEAD, E, HEAD_DIM)
    v_ij = (v_node[edges_index[1]] + v_edge).reshape(NB_HEAD, E, HEAD_DIM)

    scale = 1.0 / float(np.sqrt(HEAD_DIM))
    s = jnp.einsum("hqd,hkd->hqk", q_ij, k_ij, precision=hp) * scale
    attn = jax.nn.softmax(s, axis=-1)
    out = jnp.einsum("hqk,hkd->hqd", attn, v_ij, precision=hp)

    output_edges = out.reshape(E, N_EMBD)
    output_nodes = jax.ops.segment_sum(output_edges, edges_index[1],
                                       num_segments=nodes.shape[0])
    output_nodes = lin(output_nodes, params["Wp_nodes"], params["bp_nodes"])
    output_edges = lin(output_edges, params["Wp_edges"], params["bp_edges"])
    return output_nodes, output_edges


if __name__ == "__main__":
    key = jax.random.PRNGKey(0)
    keys = jax.random.split(key, 24)

    nodes = jax.random.normal(keys[0], (N_NODES, N_EMBD), jnp.float32)
    edges_values = jax.random.normal(keys[1], (N_EDGES, N_EMBD), jnp.float32)
    src = jax.random.randint(keys[2], (N_EDGES,), 0, N_NODES, dtype=jnp.int32)
    dst = jax.random.randint(keys[3], (N_EDGES,), 0, N_NODES, dtype=jnp.int32)
    edges_index = jnp.stack([src, dst])

    # Deterministic synthetic parameters (shapes from the module __init__).
    names = ["WQ_node", "WQ_edge", "WK_node", "WK_edge",
             "WV_node", "WV_edge", "Wp_nodes", "Wp_edges"]
    params = {}
    ki = 4
    for nm in names:
        params[nm] = 0.05 * jax.random.normal(keys[ki], (N_EMBD, N_EMBD), jnp.float32)
        ki += 1
        params["b" + nm[1:]] = 0.05 * jax.random.normal(keys[ki], (1, N_EMBD), jnp.float32)
        ki += 1

    fused = prepare_params(params)           # one-time weight fusion (not hot path)

    out_nodes, out_edges = multi_head_relational_attention(
        nodes, edges_index, edges_values, fused)
    jax.block_until_ready((out_nodes, out_edges))

    ref_nodes, ref_edges = reference_forward(nodes, edges_index, edges_values, params)
    assert out_nodes.shape == (N_NODES, N_EMBD)
    assert out_edges.shape == (N_EDGES, N_EMBD)
    np.testing.assert_allclose(np.asarray(out_nodes), np.asarray(ref_nodes),
                               rtol=2e-2, atol=2e-2)
    np.testing.assert_allclose(np.asarray(out_edges), np.asarray(ref_edges),
                               rtol=2e-2, atol=2e-2)

    print("KERNEL_OK")
</pallas_src>

<mosaic_0001>
module attributes {stable_mosaic.version = 11 : i64} {
  func.func @_fused_kernel(%arg0: memref<16x32xf32, #tpu.memory_space<vmem>>, %arg1: memref<8x32xf32, #tpu.memory_space<vmem>>, %arg2: memref<8x1xi32, #tpu.memory_space<vmem>>, %arg3: memref<8x1xi32, #tpu.memory_space<vmem>>, %arg4: memref<1x8xi32, #tpu.memory_space<vmem>>, %arg5: memref<32x96xf32, #tpu.memory_space<vmem>>, %arg6: memref<32x96xf32, #tpu.memory_space<vmem>>, %arg7: memref<1x96xf32, #tpu.memory_space<vmem>>, %arg8: memref<32x32xf32, #tpu.memory_space<vmem>>, %arg9: memref<1x32xf32, #tpu.memory_space<vmem>>, %arg10: memref<32x32xf32, #tpu.memory_space<vmem>>, %arg11: memref<1x32xf32, #tpu.memory_space<vmem>>, %arg12: memref<16x32xf32, #tpu.memory_space<vmem>>, %arg13: memref<8x32xf32, #tpu.memory_space<vmem>>) attributes {dimension_semantics = [], scalar_prefetch = 0 : i64, scratch_operands = 0 : i64, tpu.core_type = #tpu.core_type<tc>} {
    %c0 = arith.constant 0 : index
    %c0_0 = arith.constant 0 : index
    %0 = vector.load %arg0[%c0, %c0_0] : memref<16x32xf32, #tpu.memory_space<vmem>>, vector<16x32xf32>
    %c0_1 = arith.constant 0 : index
    %c0_2 = arith.constant 0 : index
    %1 = vector.load %arg1[%c0_1, %c0_2] : memref<8x32xf32, #tpu.memory_space<vmem>>, vector<8x32xf32>
    %2 = tpu.iota {dimensions = array<i32: 1>} : vector<8x16xi32>
    %c0_3 = arith.constant 0 : index
    %c0_4 = arith.constant 0 : index
    %3 = vector.load %arg2[%c0_3, %c0_4] : memref<8x1xi32, #tpu.memory_space<vmem>>, vector<8x1xi32>
    %4 = vector.broadcast %3 : vector<8x1xi32> to vector<8x16xi32>
    %5 = arith.cmpi eq, %4, %2 : vector<8x16xi32>
    %6 = arith.extui %5 : vector<8x16xi1> to vector<8x16xi32>
    %7 = arith.sitofp %6 : vector<8x16xi32> to vector<8x16xf32>
    %c0_5 = arith.constant 0 : index
    %c0_6 = arith.constant 0 : index
    %8 = vector.load %arg3[%c0_5, %c0_6] : memref<8x1xi32, #tpu.memory_space<vmem>>, vector<8x1xi32>
    %9 = vector.broadcast %8 : vector<8x1xi32> to vector<8x16xi32>
    %10 = arith.cmpi eq, %9, %2 : vector<8x16xi32>
    %11 = arith.extui %10 : vector<8x16xi1> to vector<8x16xi32>
    %12 = arith.sitofp %11 : vector<8x16xi32> to vector<8x16xf32>
    %13 = tpu.iota {dimensions = array<i32: 0>} : vector<16x8xi32>
    %c0_7 = arith.constant 0 : index
    %c0_8 = arith.constant 0 : index
    %14 = vector.load %arg4[%c0_7, %c0_8] : memref<1x8xi32, #tpu.memory_space<vmem>>, vector<1x8xi32>
    %15 = vector.broadcast %14 : vector<1x8xi32> to vector<16x8xi32>
    %16 = arith.cmpi eq, %15, %13 : vector<16x8xi32>
    %17 = arith.extui %16 : vector<16x8xi1> to vector<16x8xi32>
    %18 = arith.sitofp %17 : vector<16x8xi32> to vector<16x8xf32>
    %c0_9 = arith.constant 0 : index
    %c0_10 = arith.constant 0 : index
    %19 = vector.load %arg5[%c0_9, %c0_10] : memref<32x96xf32, #tpu.memory_space<vmem>>, vector<32x96xf32>
    %cst = arith.constant dense<0.000000e+00> : vector<16x96xf32>
    %20 = tpu.matmul %0, %19, %cst {dimension_numbers = #tpu.dot_dimension_numbers<[1], [0], [0], [1], [0, 0, 1, 1], [], []>} : vector<16x32xf32>, vector<32x96xf32>, vector<16x96xf32> -> vector<16x96xf32>
    %c0_11 = arith.constant 0 : index
    %c0_12 = arith.constant 0 : index
    %21 = vector.load %arg6[%c0_11, %c0_12] : memref<32x96xf32, #tpu.memory_space<vmem>>, vector<32x96xf32>
    %cst_13 = arith.constant dense<0.000000e+00> : vector<8x96xf32>
    %22 = tpu.matmul %1, %21, %cst_13 {dimension_numbers = #tpu.dot_dimension_numbers<[1], [0], [0], [1], [0, 0, 1, 1], [], []>} : vector<8x32xf32>, vector<32x96xf32>, vector<8x96xf32> -> vector<8x96xf32>
    %c0_14 = arith.constant 0 : index
    %c0_15 = arith.constant 0 : index
    %23 = vector.load %arg7[%c0_14, %c0_15] : memref<1x96xf32, #tpu.memory_space<vmem>>, vector<1x96xf32>
    %24 = vector.broadcast %23 : vector<1x96xf32> to vector<8x96xf32>
    %25 = arith.addf %22, %24 : vector<8x96xf32>
    %26 = vector.extract_strided_slice %20 {offsets = [0, 0], sizes = [16, 32], strides = [1, 1]} : vector<16x96xf32> to vector<16x32xf32>
    %cst_16 = arith.constant dense<0.000000e+00> : vector<8x32xf32>
    %27 = tpu.matmul %7, %26, %cst_16 {dimension_numbers = #tpu.dot_dimension_numbers<[1], [0], [0], [1], [0, 0, 1, 1], [], []>} : vector<8x16xf32>, vector<16x32xf32>, vector<8x32xf32> -> vector<8x32xf32>
    %28 = vector.extract_strided_slice %20 {offsets = [0, 32], sizes = [16, 64], strides = [1, 1]} : vector<16x96xf32> to vector<16x64xf32>
    %cst_17 = arith.constant dense<0.000000e+00> : vector<8x64xf32>
    %29 = tpu.matmul %12, %28, %cst_17 {dimension_numbers = #tpu.dot_dimension_numbers<[1], [0], [0], [1], [0, 0, 1, 1], [], []>} : vector<8x16xf32>, vector<16x64xf32>, vector<8x64xf32> -> vector<8x64xf32>
    %30 = vector.extract_strided_slice %25 {offsets = [0, 0], sizes = [8, 32], strides = [1, 1]} : vector<8x96xf32> to vector<8x32xf32>
    %31 = arith.addf %27, %30 : vector<8x32xf32>
    %32 = vector.extract_strided_slice %29 {offsets = [0, 0], sizes = [8, 32], strides = [1, 1]} : vector<8x64xf32> to vector<8x32xf32>
    %33 = vector.extract_strided_slice %25 {offsets = [0, 32], sizes = [8, 32], strides = [1, 1]} : vector<8x96xf32> to vector<8x32xf32>
    %34 = arith.addf %32, %33 : vector<8x32xf32>
    %35 = vector.extract_strided_slice %29 {offsets = [0, 32], sizes = [8, 32], strides = [1, 1]} : vector<8x64xf32> to vector<8x32xf32>
    %36 = vector.extract_strided_slice %25 {offsets = [0, 64], sizes = [8, 32], strides = [1, 1]} : vector<8x96xf32> to vector<8x32xf32>
    %37 = arith.addf %35, %36 : vector<8x32xf32>
    %38 = tpu.iota {dimensions = array<i32: 0>} : vector<32x8xi32>
    %39 = tpu.iota {dimensions = array<i32: 1>} : vector<32x8xi32>
    %c0_i32 = arith.constant 0 : i32
    %40 = vector.broadcast %c0_i32 : i32 to vector<32x8xi32>
    %41 = arith.addi %39, %40 : vector<32x8xi32>
    %42 = arith.cmpi eq, %38, %41 : vector<32x8xi32>
    %43 = arith.extui %42 : vector<32x8xi1> to vector<32x8xi32>
    %44 = arith.sitofp %43 : vector<32x8xi32> to vector<32x8xf32>
    %c8_i32 = arith.constant 8 : i32
    %45 = vector.broadcast %c8_i32 : i32 to vector<32x8xi32>
    %46 = arith.addi %39, %45 : vector<32x8xi32>
    %47 = arith.cmpi eq, %38, %46 : vector<32x8xi32>
    %48 = arith.extui %47 : vector<32x8xi1> to vector<32x8xi32>
    %49 = arith.sitofp %48 : vector<32x8xi32> to vector<32x8xf32>
    %c16_i32 = arith.constant 16 : i32
    %50 = vector.broadcast %c16_i32 : i32 to vector<32x8xi32>
    %51 = arith.addi %39, %50 : vector<32x8xi32>
    %52 = arith.cmpi eq, %38, %51 : vector<32x8xi32>
    %53 = arith.extui %52 : vector<32x8xi1> to vector<32x8xi32>
    %54 = arith.sitofp %53 : vector<32x8xi32> to vector<32x8xf32>
    %c24_i32 = arith.constant 24 : i32
    %55 = vector.broadcast %c24_i32 : i32 to vector<32x8xi32>
    %56 = arith.addi %39, %55 : vector<32x8xi32>
    %57 = arith.cmpi eq, %38, %56 : vector<32x8xi32>
    %58 = arith.extui %57 : vector<32x8xi1> to vector<32x8xi32>
    %59 = arith.sitofp %58 : vector<32x8xi32> to vector<32x8xf32>
    %60 = vector.extract_strided_slice %31 {offsets = [0, 0], sizes = [8, 8], strides = [1, 1]} : vector<8x32xf32> to vector<8x8xf32>
    %cst_18 = arith.constant dense<0.000000e+00> : vector<32x8xf32>
    %61 = tpu.matmul %44, %60, %cst_18 {dimension_numbers = #tpu.dot_dimension_numbers<[1], [0], [0], [1], [0, 0, 1, 1], [], []>} : vector<32x8xf32>, vector<8x8xf32>, vector<32x8xf32> -> vector<32x8xf32>
    %62 = vector.extract_strided_slice %31 {offsets = [0, 8], sizes = [8, 8], strides = [1, 1]} : vector<8x32xf32> to vector<8x8xf32>
    %cst_19 = arith.constant dense<0.000000e+00> : vector<32x8xf32>
    %63 = tpu.matmul %49, %62, %cst_19 {dimension_numbers = #tpu.dot_dimension_numbers<[1], [0], [0], [1], [0, 0, 1, 1], [], []>} : vector<32x8xf32>, vector<8x8xf32>, vector<32x8xf32> -> vector<32x8xf32>
    %64 = arith.addf %61, %63 : vector<32x8xf32>
    %65 = vector.extract_strided_slice %31 {offsets = [0, 16], sizes = [8, 8], strides = [1, 1]} : vector<8x32xf32> to vector<8x8xf32>
    %cst_20 = arith.constant dense<0.000000e+00> : vector<32x8xf32>
    %66 = tpu.matmul %54, %65, %cst_20 {dimension_numbers = #tpu.dot_dimension_numbers<[1], [0], [0], [1], [0, 0, 1, 1], [], []>} : vector<32x8xf32>, vector<8x8xf32>, vector<32x8xf32> -> vector<32x8xf32>
    %67 = arith.addf %64, %66 : vector<32x8xf32>
    %68 = vector.extract_strided_slice %31 {offsets = [0, 24], sizes = [8, 8], strides = [1, 1]} : vector<8x32xf32> to vector<8x8xf32>
    %cst_21 = arith.constant dense<0.000000e+00> : vector<32x8xf32>
    %69 = tpu.matmul %59, %68, %cst_21 {dimension_numbers = #tpu.dot_dimension_numbers<[1], [0], [0], [1], [0, 0, 1, 1], [], []>} : vector<32x8xf32>, vector<8x8xf32>, vector<32x8xf32> -> vector<32x8xf32>
    %70 = arith.addf %67, %69 : vector<32x8xf32>
    %71 = vector.extract_strided_slice %34 {offsets = [0, 0], sizes = [8, 8], strides = [1, 1]} : vector<8x32xf32> to vector<8x8xf32>
    %cst_22 = arith.constant dense<0.000000e+00> : vector<32x8xf32>
    %72 = tpu.matmul %44, %71, %cst_22 {dimension_numbers = #tpu.dot_dimension_numbers<[1], [0], [0], [1], [0, 0, 1, 1], [], []>} : vector<32x8xf32>, vector<8x8xf32>, vector<32x8xf32> -> vector<32x8xf32>
    %73 = vector.extract_strided_slice %34 {offsets = [0, 8], sizes = [8, 8], strides = [1, 1]} : vector<8x32xf32> to vector<8x8xf32>
    %cst_23 = arith.constant dense<0.000000e+00> : vector<32x8xf32>
    %74 = tpu.matmul %49, %73, %cst_23 {dimension_numbers = #tpu.dot_dimension_numbers<[1], [0], [0], [1], [0, 0, 1, 1], [], []>} : vector<32x8xf32>, vector<8x8xf32>, vector<32x8xf32> -> vector<32x8xf32>
    %75 = arith.addf %72, %74 : vector<32x8xf32>
    %76 = vector.extract_strided_slice %34 {offsets = [0, 16], sizes = [8, 8], strides = [1, 1]} : vector<8x32xf32> to vector<8x8xf32>
    %cst_24 = arith.constant dense<0.000000e+00> : vector<32x8xf32>
    %77 = tpu.matmul %54, %76, %cst_24 {dimension_numbers = #tpu.dot_dimension_numbers<[1], [0], [0], [1], [0, 0, 1, 1], [], []>} : vector<32x8xf32>, vector<8x8xf32>, vector<32x8xf32> -> vector<32x8xf32>
    %78 = arith.addf %75, %77 : vector<32x8xf32>
    %79 = vector.extract_strided_slice %34 {offsets = [0, 24], sizes = [8, 8], strides = [1, 1]} : vector<8x32xf32> to vector<8x8xf32>
    %cst_25 = arith.constant dense<0.000000e+00> : vector<32x8xf32>
    %80 = tpu.matmul %59, %79, %cst_25 {dimension_numbers = #tpu.dot_dimension_numbers<[1], [0], [0], [1], [0, 0, 1, 1], [], []>} : vector<32x8xf32>, vector<8x8xf32>, vector<32x8xf32> -> vector<32x8xf32>
    %81 = arith.addf %78, %80 : vector<32x8xf32>
    %82 = vector.extract_strided_slice %37 {offsets = [0, 0], sizes = [8, 8], strides = [1, 1]} : vector<8x32xf32> to vector<8x8xf32>
    %cst_26 = arith.constant dense<0.000000e+00> : vector<32x8xf32>
    %83 = tpu.matmul %44, %82, %cst_26 {dimension_numbers = #tpu.dot_dimension_numbers<[1], [0], [0], [1], [0, 0, 1, 1], [], []>} : vector<32x8xf32>, vector<8x8xf32>, vector<32x8xf32> -> vector<32x8xf32>
    %84 = vector.extract_strided_slice %37 {offsets = [0, 8], sizes = [8, 8], strides = [1, 1]} : vector<8x32xf32> to vector<8x8xf32>
    %cst_27 = arith.constant dense<0.000000e+00> : vector<32x8xf32>
    %85 = tpu.matmul %49, %84, %cst_27 {dimension_numbers = #tpu.dot_dimension_numbers<[1], [0], [0], [1], [0, 0, 1, 1], [], []>} : vector<32x8xf32>, vector<8x8xf32>, vector<32x8xf32> -> vector<32x8xf32>
    %86 = arith.addf %83, %85 : vector<32x8xf32>
    %87 = vector.extract_strided_slice %37 {offsets = [0, 16], sizes = [8, 8], strides = [1, 1]} : vector<8x32xf32> to vector<8x8xf32>
    %cst_28 = arith.constant dense<0.000000e+00> : vector<32x8xf32>
    %88 = tpu.matmul %54, %87, %cst_28 {dimension_numbers = #tpu.dot_dimension_numbers<[1], [0], [0], [1], [0, 0, 1, 1], [], []>} : vector<32x8xf32>, vector<8x8xf32>, vector<32x8xf32> -> vector<32x8xf32>
    %89 = arith.addf %86, %88 : vector<32x8xf32>
    %90 = vector.extract_strided_slice %37 {offsets = [0, 24], sizes = [8, 8], strides = [1, 1]} : vector<8x32xf32> to vector<8x8xf32>
    %cst_29 = arith.constant dense<0.000000e+00> : vector<32x8xf32>
    %91 = tpu.matmul %59, %90, %cst_29 {dimension_numbers = #tpu.dot_dimension_numbers<[1], [0], [0], [1], [0, 0, 1, 1], [], []>} : vector<32x8xf32>, vector<8x8xf32>, vector<32x8xf32> -> vector<32x8xf32>
    %92 = arith.addf %89, %91 : vector<32x8xf32>
    %93 = tpu.iota {dimensions = array<i32: 0>} : vector<32x32xi32>
    %94 = tpu.iota {dimensions = array<i32: 1>} : vector<32x32xi32>
    %c7_i32 = arith.constant 7 : i32
    %95 = vector.broadcast %c7_i32 : i32 to vector<32x32xi32>
    %96 = arith.andi %93, %95 : vector<32x32xi32>
    %c1_i32 = arith.constant 1 : i32
    %97 = vector.broadcast %c1_i32 : i32 to vector<32x32xi32>
    %98 = arith.shrsi %96, %97 : vector<32x32xi32>
    %c7_i32_30 = arith.constant 7 : i32
    %99 = vector.broadcast %c7_i32_30 : i32 to vector<32x32xi32>
    %100 = arith.andi %94, %99 : vector<32x32xi32>
    %c1_i32_31 = arith.constant 1 : i32
    %101 = vector.broadcast %c1_i32_31 : i32 to vector<32x32xi32>
    %102 = arith.shrsi %100, %101 : vector<32x32xi32>
    %103 = arith.cmpi eq, %98, %102 : vector<32x32xi32>
    %cst_32 = arith.constant dense<0.000000e+00> : vector<32x32xf32>
    %104 = tpu.matmul %70, %81, %cst_32 {dimension_numbers = #tpu.dot_dimension_numbers<[1], [1], [0], [0], [0, 0, 1, 0], [], []>} : vector<32x8xf32>, vector<32x8xf32>, vector<32x32xf32> -> vector<32x32xf32>
    %cst_33 = arith.constant 0.353553385 : f32
    %105 = vector.broadcast %cst_33 : f32 to vector<32x32xf32>
    %106 = arith.mulf %104, %105 : vector<32x32xf32>
    %cst_34 = arith.constant -1.000000e+30 : f32
    %107 = vector.broadcast %cst_34 : f32 to vector<32x32xf32>
    %108 = arith.select %103, %106, %107 : vector<32x32xi1>, vector<32x32xf32>
    %cst_35 = arith.constant dense<0xFF800000> : vector<32xf32>
    %109 = vector.multi_reduction <maximumf>, %108, %cst_35 [1] : vector<32x32xf32> to vector<32xf32>
    %110 = vector.shape_cast %109 : vector<32xf32> to vector<32x1xf32>
    %111 = vector.broadcast %110 : vector<32x1xf32> to vector<32x32xf32>
    %112 = arith.subf %108, %111 : vector<32x32xf32>
    %113 = math.exp %112 : vector<32x32xf32>
    %cst_36 = arith.constant 0.000000e+00 : f32
    %114 = vector.broadcast %cst_36 : f32 to vector<32x32xf32>
    %115 = arith.select %103, %113, %114 : vector<32x32xi1>, vector<32x32xf32>
    %cst_37 = arith.constant dense<0.000000e+00> : vector<32xf32>
    %116 = vector.multi_reduction <add>, %115, %cst_37 [1] : vector<32x32xf32> to vector<32xf32>
    %117 = vector.shape_cast %116 : vector<32xf32> to vector<32x1xf32>
    %118 = tpu.reciprocal %117 {approx = true} : vector<32x1xf32> -> vector<32x1xf32>
    %119 = vector.broadcast %118 : vector<32x1xf32> to vector<32x32xf32>
    %120 = arith.mulf %115, %119 : vector<32x32xf32>
    %cst_38 = arith.constant dense<0.000000e+00> : vector<32x8xf32>
    %121 = tpu.matmul %120, %92, %cst_38 {dimension_numbers = #tpu.dot_dimension_numbers<[1], [0], [0], [1], [0, 0, 1, 1], [], []>} : vector<32x32xf32>, vector<32x8xf32>, vector<32x8xf32> -> vector<32x8xf32>
    %122 = vector.extract_strided_slice %121 {offsets = [0, 0], sizes = [8, 8], strides = [1, 1]} : vector<32x8xf32> to vector<8x8xf32>
    %c0_39 = arith.constant 0 : index
    %c0_40 = arith.constant 0 : index
    %123 = vector.load %arg10[%c0_39, %c0_40] : memref<32x32xf32, #tpu.memory_space<vmem>>, vector<8x32xf32>
    %cst_41 = arith.constant dense<0.000000e+00> : vector<8x32xf32>
    %124 = tpu.matmul %122, %123, %cst_41 {dimension_numbers = #tpu.dot_dimension_numbers<[1], [0], [0], [1], [0, 0, 1, 1], [], []>} : vector<8x8xf32>, vector<8x32xf32>, vector<8x32xf32> -> vector<8x32xf32>
    %c0_42 = arith.constant 0 : index
    %c0_43 = arith.constant 0 : index
    %125 = vector.load %arg8[%c0_42, %c0_43] : memref<32x32xf32, #tpu.memory_space<vmem>>, vector<8x32xf32>
    %cst_44 = arith.constant dense<0.000000e+00> : vector<8x32xf32>
    %126 = tpu.matmul %122, %125, %cst_44 {dimension_numbers = #tpu.dot_dimension_numbers<[1], [0], [0], [1], [0, 0, 1, 1], [], []>} : vector<8x8xf32>, vector<8x32xf32>, vector<8x32xf32> -> vector<8x32xf32>
    %127 = vector.extract_strided_slice %121 {offsets = [8, 0], sizes = [8, 8], strides = [1, 1]} : vector<32x8xf32> to vector<8x8xf32>
    %c8 = arith.constant 8 : index
    %c0_45 = arith.constant 0 : index
    %128 = vector.load %arg10[%c8, %c0_45] : memref<32x32xf32, #tpu.memory_space<vmem>>, vector<8x32xf32>
    %cst_46 = arith.constant dense<0.000000e+00> : vector<8x32xf32>
    %129 = tpu.matmul %127, %128, %cst_46 {dimension_numbers = #tpu.dot_dimension_numbers<[1], [0], [0], [1], [0, 0, 1, 1], [], []>} : vector<8x8xf32>, vector<8x32xf32>, vector<8x32xf32> -> vector<8x32xf32>
    %130 = arith.addf %124, %129 : vector<8x32xf32>
    %c8_47 = arith.constant 8 : index
    %c0_48 = arith.constant 0 : index
    %131 = vector.load %arg8[%c8_47, %c0_48] : memref<32x32xf32, #tpu.memory_space<vmem>>, vector<8x32xf32>
    %cst_49 = arith.constant dense<0.000000e+00> : vector<8x32xf32>
    %132 = tpu.matmul %127, %131, %cst_49 {dimension_numbers = #tpu.dot_dimension_numbers<[1], [0], [0], [1], [0, 0, 1, 1], [], []>} : vector<8x8xf32>, vector<8x32xf32>, vector<8x32xf32> -> vector<8x32xf32>
    %133 = arith.addf %126, %132 : vector<8x32xf32>
    %134 = vector.extract_strided_slice %121 {offsets = [16, 0], sizes = [8, 8], strides = [1, 1]} : vector<32x8xf32> to vector<8x8xf32>
    %c16 = arith.constant 16 : index
    %c0_50 = arith.constant 0 : index
    %135 = vector.load %arg10[%c16, %c0_50] : memref<32x32xf32, #tpu.memory_space<vmem>>, vector<8x32xf32>
    %cst_51 = arith.constant dense<0.000000e+00> : vector<8x32xf32>
    %136 = tpu.matmul %134, %135, %cst_51 {dimension_numbers = #tpu.dot_dimension_numbers<[1], [0], [0], [1], [0, 0, 1, 1], [], []>} : vector<8x8xf32>, vector<8x32xf32>, vector<8x32xf32> -> vector<8x32xf32>
    %137 = arith.addf %130, %136 : vector<8x32xf32>
    %c16_52 = arith.constant 16 : index
    %c0_53 = arith.constant 0 : index
    %138 = vector.load %arg8[%c16_52, %c0_53] : memref<32x32xf32, #tpu.memory_space<vmem>>, vector<8x32xf32>
    %cst_54 = arith.constant dense<0.000000e+00> : vector<8x32xf32>
    %139 = tpu.matmul %134, %138, %cst_54 {dimension_numbers = #tpu.dot_dimension_numbers<[1], [0], [0], [1], [0, 0, 1, 1], [], []>} : vector<8x8xf32>, vector<8x32xf32>, vector<8x32xf32> -> vector<8x32xf32>
    %140 = arith.addf %133, %139 : vector<8x32xf32>
    %141 = vector.extract_strided_slice %121 {offsets = [24, 0], sizes = [8, 8], strides = [1, 1]} : vector<32x8xf32> to vector<8x8xf32>
    %c24 = arith.constant 24 : index
    %c0_55 = arith.constant 0 : index
    %142 = vector.load %arg10[%c24, %c0_55] : memref<32x32xf32, #tpu.memory_space<vmem>>, vector<8x32xf32>
    %cst_56 = arith.constant dense<0.000000e+00> : vector<8x32xf32>
    %143 = tpu.matmul %141, %142, %cst_56 {dimension_numbers = #tpu.dot_dimension_numbers<[1], [0], [0], [1], [0, 0, 1, 1], [], []>} : vector<8x8xf32>, vector<8x32xf32>, vector<8x32xf32> -> vector<8x32xf32>
    %144 = arith.addf %137, %143 : vector<8x32xf32>
    %c24_57 = arith.constant 24 : index
    %c0_58 = arith.constant 0 : index
    %145 = vector.load %arg8[%c24_57, %c0_58] : memref<32x32xf32, #tpu.memory_space<vmem>>, vector<8x32xf32>
    %cst_59 = arith.constant dense<0.000000e+00> : vector<8x32xf32>
    %146 = tpu.matmul %141, %145, %cst_59 {dimension_numbers = #tpu.dot_dimension_numbers<[1], [0], [0], [1], [0, 0, 1, 1], [], []>} : vector<8x8xf32>, vector<8x32xf32>, vector<8x32xf32> -> vector<8x32xf32>
    %147 = arith.addf %140, %146 : vector<8x32xf32>
    %c0_60 = arith.constant 0 : index
    %c0_61 = arith.constant 0 : index
    %148 = vector.load %arg11[%c0_60, %c0_61] : memref<1x32xf32, #tpu.memory_space<vmem>>, vector<1x32xf32>
    %149 = vector.broadcast %148 : vector<1x32xf32> to vector<8x32xf32>
    %150 = arith.addf %144, %149 : vector<8x32xf32>
    %c0_62 = arith.constant 0 : index
    %c0_63 = arith.constant 0 : index
    %151 = vector.load %arg13[%c0_62, %c0_63] : memref<8x32xf32, #tpu.memory_space<vmem>>, vector<8x32xf32>
    tpu.vector_store %arg13[%c0_62, %c0_63], %150 {strides = array<i32>} : memref<8x32xf32, #tpu.memory_space<vmem>>, vector<8x32xf32>,
    %cst_64 = arith.constant dense<0.000000e+00> : vector<16x32xf32>
    %152 = tpu.matmul %18, %147, %cst_64 {dimension_numbers = #tpu.dot_dimension_numbers<[1], [0], [0], [1], [0, 0, 1, 1], [], []>} : vector<16x8xf32>, vector<8x32xf32>, vector<16x32xf32> -> vector<16x32xf32>
    %c0_65 = arith.constant 0 : index
    %c0_66 = arith.constant 0 : index
    %153 = vector.load %arg9[%c0_65, %c0_66] : memref<1x32xf32, #tpu.memory_space<vmem>>, vector<1x32xf32>
    %154 = vector.broadcast %153 : vector<1x32xf32> to vector<16x32xf32>
    %155 = arith.addf %152, %154 : vector<16x32xf32>
    %c0_67 = arith.constant 0 : index
    %c0_68 = arith.constant 0 : index
    %156 = vector.load %arg12[%c0_67, %c0_68] : memref<16x32xf32, #tpu.memory_space<vmem>>, vector<16x32xf32>
    tpu.vector_store %arg12[%c0_67, %c0_68], %155 {strides = array<i32>} : memref<16x32xf32, #tpu.memory_space<vmem>>, vector<16x32xf32>,
    return
  }
}

</mosaic_0001>

<llo_original>
// kernel: multi_head_relational_attention.1
$region0: #{multi_head_relational_attention.1}
  #allocation0 [shape = 'u32[]', space=smem, size = 0x4, offset = 0x4, fixed_abs, tag = 'smem constant byte address 0x4 - core index']
  #allocation1 [shape = 'u32[144,128]{1,0:T(1,128)}', space=vmem, size = 0x12000, scoped, tag = 'internal scratch']
  %s0 = inlined_call_operand.hbm [shape: f32[16,32], index: 0, kind: input, shape index: {}]
  %s1 = inlined_call_operand.vmem [shape: f32[8,32], index: 1, kind: input, shape index: {}]
  %s2 = inlined_call_operand.vmem [shape: s32[8,1], index: 2, kind: input, shape index: {}]
  %s3 = inlined_call_operand.vmem [shape: s32[8,1], index: 3, kind: input, shape index: {}]
  %s4 = inlined_call_operand.vmem [shape: s32[1,8], index: 4, kind: input, shape index: {}]
  %s5 = inlined_call_operand.vmem [shape: f32[32,96], index: 5, kind: input, shape index: {}]
  %s6 = inlined_call_operand.hbm [shape: f32[32,96], index: 6, kind: input, shape index: {}]
  %s7 = inlined_call_operand.vmem [shape: f32[1,96], index: 7, kind: input, shape index: {}]
  %s8 = inlined_call_operand.hbm [shape: f32[32,32], index: 8, kind: input, shape index: {}]
  %s9 = inlined_call_operand.hbm [shape: f32[1,32], index: 9, kind: input, shape index: {}]
  %s10 = inlined_call_operand.hbm [shape: f32[32,32], index: 10, kind: input, shape index: {}]
  %s11 = inlined_call_operand.hbm [shape: f32[1,32], index: 11, kind: input, shape index: {}]
  %s12 = inlined_call_operand.hbm [shape: f32[16,32], index: 12, kind: output, shape index: {0}]
  %s13 = inlined_call_operand.hbm [shape: f32[8,32], index: 13, kind: output, shape index: {1}]
  %14 = xla_tuple %s12, %s13
  %s15 = sld [smem:[#allocation0]]
  $region90: #{multi_head_relational_attention.1} parent=0
    _
  %s17 = ssub.s32 1, %s15
  %s18 = scalar_select 0, %s17, %s15
  $region1: #{multi_head_relational_attention.1} parent=0
    #allocation2 [shape = 'u8[8192]{0}', space=vmem, size = 0x2000, scoped, tag = 'input window, operand 0, single buffered']
    #allocation3 [shape = 's32[1]{0}', space=sflag, size = 0x4, scoped, tag = 'scoped memory for multi_head_relational_attention.1']
    #allocation4 [shape = 's32[1]{0}', space=sflag, size = 0x4, scoped, tag = 'scoped memory for multi_head_relational_attention.1']
    #allocation5 [shape = 'u8[16384]{0}', space=vmem, size = 0x4000, scoped, tag = 'input window, operand 6, single buffered']
    #allocation6 [shape = 's32[1]{0}', space=sflag, size = 0x4, scoped, tag = 'scoped memory for multi_head_relational_attention.1']
    #allocation7 [shape = 'u8[16384]{0}', space=vmem, size = 0x4000, scoped, tag = 'input window, operand 8, single buffered']
    #allocation8 [shape = 'u8[512]{0}', space=vmem, size = 0x400, scoped, tag = 'input window, operand 9, single buffered']
    #allocation9 [shape = 's32[1]{0}', space=sflag, size = 0x4, scoped, tag = 'scoped memory for multi_head_relational_attention.1']
    #allocation10 [shape = 'u8[16384]{0}', space=vmem, size = 0x4000, scoped, tag = 'input window, operand 10, single buffered']
    #allocation11 [shape = 'u8[512]{0}', space=vmem, size = 0x400, scoped, tag = 'input window, operand 11, single buffered']
    #allocation12 [shape = 's32[1]{0}', space=sflag, size = 0x4, scoped, tag = 'scoped memory for multi_head_relational_attention.1']
    #allocation13 [shape = 'u8[8192]{0}', space=vmem, size = 0x2000, scoped, tag = 'output window, operand 0, single buffered']
    #allocation14 [shape = 'u8[4096]{0}', space=vmem, size = 0x1000, scoped, tag = 'output window, operand 1, single buffered']
    #allocation15 [shape = 's32[1]{0}', space=sflag, size = 0x4, scoped, tag = 'scoped memory for multi_head_relational_attention.1']
    %19 = vsyncpa [#allocation3], 0
    %20 = vsyncpa [#allocation6], 0
    %21 = vsyncpa [#allocation9], 0
    %22 = vsyncpa [#allocation12], 0
    %23 = vsyncpa [#allocation4], 0
    %24 = vsyncpa [#allocation15], 0
    // Predicated region
    $region2: #{multi_head_relational_attention.1} parent=1 // pred_check
      _
    $region3: #{multi_head_relational_attention.1} parent=1 // pred_check_branch
      %26 = sbr.rel (0) target = $region5
    $region4: #{multi_head_relational_attention.1} parent=1 // pred_region
      %s28 = ssub.s32 256, 256
      %29 = vsyncadd [#allocation3], %s28
      %s30 = sshll.u32 [#allocation2], 4
      %s31 = int_to_ptr.vmem [resolvable:$true] %s30
      %36 = dma.hbm_to_vmem [thread:$0]  %s0, 256, %s31, [#allocation3], 128, 128, 8
    $region5: #{multi_head_relational_attention.1} parent=1 // pred_fallthru
      _
    // Predicated region
    $region6: #{multi_head_relational_attention.1} parent=1 // pred_check
      _
    $region7: #{multi_head_relational_attention.1} parent=1 // pred_check_branch
      %38 = sbr.rel (0) target = $region9
    $region8: #{multi_head_relational_attention.1} parent=1 // pred_region
      _
    $region9: #{multi_head_relational_attention.1} parent=1 // pred_fallthru
      _
    // Predicated region
    $region10: #{multi_head_relational_attention.1} parent=1 // pred_check
      _
    $region11: #{multi_head_relational_attention.1} parent=1 // pred_check_branch
      %40 = sbr.rel (0) target = $region13
    $region12: #{multi_head_relational_attention.1} parent=1 // pred_region
      _
    $region13: #{multi_head_relational_attention.1} parent=1 // pred_fallthru
      _
    // Predicated region
    $region14: #{multi_head_relational_attention.1} parent=1 // pred_check
      _
    $region15: #{multi_head_relational_attention.1} parent=1 // pred_check_branch
      %42 = sbr.rel (0) target = $region17
    $region16: #{multi_head_relational_attention.1} parent=1 // pred_region
      _
    $region17: #{multi_head_relational_attention.1} parent=1 // pred_fallthru
      _
    // Predicated region
    $region18: #{multi_head_relational_attention.1} parent=1 // pred_check
      _
    $region19: #{multi_head_relational_attention.1} parent=1 // pred_check_branch
      %44 = sbr.rel (0) target = $region21
    $region20: #{multi_head_relational_attention.1} parent=1 // pred_region
      _
    $region21: #{multi_head_relational_attention.1} parent=1 // pred_fallthru
      _
    // Predicated region
    $region22: #{multi_head_relational_attention.1} parent=1 // pred_check
      _
    $region23: #{multi_head_relational_attention.1} parent=1 // pred_check_branch
      %46 = sbr.rel (0) target = $region25
    $region24: #{multi_head_relational_attention.1} parent=1 // pred_region
      _
    $region25: #{multi_head_relational_attention.1} parent=1 // pred_fallthru
      _
    // Predicated region
    $region26: #{multi_head_relational_attention.1} parent=1 // pred_check
      _
    $region27: #{multi_head_relational_attention.1} parent=1 // pred_check_branch
      %48 = sbr.rel (0) target = $region29
    $region28: #{multi_head_relational_attention.1} parent=1 // pred_region
      %s50 = ssub.s32 512, 512
      %51 = vsyncadd [#allocation6], %s50
      %s52 = sshll.u32 [#allocation5], 4
      %s53 = int_to_ptr.vmem [resolvable:$true] %s52
      %58 = dma.hbm_to_vmem [thread:$0]  %s6, 512, %s53, [#allocation6], 128, 128, 8
    $region29: #{multi_head_relational_attention.1} parent=1 // pred_fallthru
      _
    // Predicated region
    $region30: #{multi_head_relational_attention.1} parent=1 // pred_check
      _
    $region31: #{multi_head_relational_attention.1} parent=1 // pred_check_branch
      %60 = sbr.rel (0) target = $region33
    $region32: #{multi_head_relational_attention.1} parent=1 // pred_region
      _
    $region33: #{multi_head_relational_attention.1} parent=1 // pred_fallthru
      _
    // Predicated region
    $region34: #{multi_head_relational_attention.1} parent=1 // pred_check
      _
    $region35: #{multi_head_relational_attention.1} parent=1 // pred_check_branch
      %62 = sbr.rel (0) target = $region37
    $region36: #{multi_head_relational_attention.1} parent=1 // pred_region
      %s64 = ssub.s32 512, 512
      %65 = vsyncadd [#allocation6], %s64
      %s66 = sshll.u32 [#allocation7], 4
      %s67 = int_to_ptr.vmem [resolvable:$true] %s66
      %72 = dma.hbm_to_vmem [thread:$0]  %s8, 512, %s67, [#allocation6], 128, 128, 8
    $region37: #{multi_head_relational_attention.1} parent=1 // pred_fallthru
      _
    // Predicated region
    $region38: #{multi_head_relational_attention.1} parent=1 // pred_check
      _
    $region39: #{multi_head_relational_attention.1} parent=1 // pred_check_branch
      %74 = sbr.rel (0) target = $region41
    $region40: #{multi_head_relational_attention.1} parent=1 // pred_region
      %s76 = ssub.s32 16, 16
      %77 = vsyncadd [#allocation9], %s76
      %s79 = sshll.u32 [#allocation8], 4
      %s80 = int_to_ptr.vmem [resolvable:$true] %s79
      %82 = dma.hbm_to_vmem [thread:$0]  %s9, 16, %s80, [#allocation9]
    $region41: #{multi_head_relational_attention.1} parent=1 // pred_fallthru
      _
    // Predicated region
    $region42: #{multi_head_relational_attention.1} parent=1 // pred_check
      _
    $region43: #{multi_head_relational_attention.1} parent=1 // pred_check_branch
      %84 = sbr.rel (0) target = $region45
    $region44: #{multi_head_relational_attention.1} parent=1 // pred_region
      %s86 = ssub.s32 512, 512
      %87 = vsyncadd [#allocation9], %s86
      %s88 = sshll.u32 [#allocation10], 4
      %s89 = int_to_ptr.vmem [resolvable:$true] %s88
      %94 = dma.hbm_to_vmem [thread:$0]  %s10, 512, %s89, [#allocation9], 128, 128, 8
    $region45: #{multi_head_relational_attention.1} parent=1 // pred_fallthru
      _
    // Predicated region
    $region46: #{multi_head_relational_attention.1} parent=1 // pred_check
      _
    $region47: #{multi_head_relational_attention.1} parent=1 // pred_check_branch
      %96 = sbr.rel (0) target = $region49
    $region48: #{multi_head_relational_attention.1} parent=1 // pred_region
      %s98 = ssub.s32 16, 16
      %99 = vsyncadd [#allocation12], %s98
      %s101 = sshll.u32 [#allocation11], 4
      %s102 = int_to_ptr.vmem [resolvable:$true] %s101
      %104 = dma.hbm_to_vmem [thread:$0]  %s11, 16, %s102, [#allocation12]
    $region49: #{multi_head_relational_attention.1} parent=1 // pred_fallthru
      _
    // Predicated region
    $region50: #{multi_head_relational_attention.1} parent=1 // pred_check
      _
    $region51: #{multi_head_relational_attention.1} parent=1 // pred_check_branch
      %106 = sbr.rel (0) target = $region53
    $region52: #{multi_head_relational_attention.1} parent=1 // pred_region
      %107 = dma.done [#allocation3], 256
    $region53: #{multi_head_relational_attention.1} parent=1 // pred_fallthru
      _
    // Predicated region
    $region54: #{multi_head_relational_attention.1} parent=1 // pred_check
      _
    $region55: #{multi_head_relational_attention.1} parent=1 // pred_check_branch
      %109 = sbr.rel (0) target = $region57
    $region56: #{multi_head_relational_attention.1} parent=1 // pred_region
      %110 = dma.done [#allocation6], 512
    $region57: #{multi_head_relational_attention.1} parent=1 // pred_fallthru
      _
    // Predicated region
    $region58: #{multi_head_relational_attention.1} parent=1 // pred_check
      _
    $region59: #{multi_head_relational_attention.1} parent=1 // pred_check_branch
      %112 = sbr.rel (0) target = $region61
    $region60: #{multi_head_relational_attention.1} parent=1 // pred_region
      %113 = dma.done [#allocation6], 512
    $region61: #{multi_head_relational_attention.1} parent=1 // pred_fallthru
      _
    // Predicated region
    $region62: #{multi_head_relational_attention.1} parent=1 // pred_check
      _
    $region63: #{multi_head_relational_attention.1} parent=1 // pred_check_branch
      %115 = sbr.rel (0) target = $region65
    $region64: #{multi_head_relational_attention.1} parent=1 // pred_region
      %116 = dma.done [#allocation9], 16
    $region65: #{multi_head_relational_attention.1} parent=1 // pred_fallthru
      _
    // Predicated region
    $region66: #{multi_head_relational_attention.1} parent=1 // pred_check
      _
    $region67: #{multi_head_relational_attention.1} parent=1 // pred_check_branch
      %118 = sbr.rel (0) target = $region69
    $region68: #{multi_head_relational_attention.1} parent=1 // pred_region
      %119 = dma.done [#allocation9], 512
    $region69: #{multi_head_relational_attention.1} parent=1 // pred_fallthru
      _
    // Predicated region
    $region70: #{multi_head_relational_attention.1} parent=1 // pred_check
      _
    $region71: #{multi_head_relational_attention.1} parent=1 // pred_check_branch
      %121 = sbr.rel (0) target = $region73
    $region72: #{multi_head_relational_attention.1} parent=1 // pred_region
      %122 = dma.done [#allocation12], 16
    $region73: #{multi_head_relational_attention.1} parent=1 // pred_fallthru
      _
    %v123 = vld [vmem:[#allocation2] sm:$0xff]
    %v124 = vld [vmem:[#allocation2 + $0x8] sm:$0xff]
    %v125 = vld [vmem:[%s1] sm:$0xff]
    %v126 = vlaneseq
    %v127 = vand.u32 %v126, 127
    %v128 = vld [vmem:[%s2] sm:$0xff]
    %129 = vset.pattern.permute.xlu0 0
    %130 = vperm.xlu0 %129, %v128
    %v131 = vpop.permute.xlu0 %130
    %vm132 = vcmp.eq.s32.totalorder %v131, %v127
    %v133 = vsel %vm132, 1, 0
    %v134 = vcvt.s32.f32 %v133
    %v135 = vld [vmem:[%s3] sm:$0xff]
    %136 = vset.pattern.permute.xlu0 0
    %137 = vperm.xlu0 %136, %v135
    %v138 = vpop.permute.xlu0 %137
    %vm139 = vcmp.eq.s32.totalorder %v138, %v127
    %v140 = vsel %vm139, 1, 0
    %v141 = vcvt.s32.f32 %v140
    %v142 = vlaneseq
    %v143 = vshrl.u32 %v142, 7
    %v144 = vadd.s32 %v143, 8
    %v145 = vld [vmem:[%s4] sm:$0x1]
    %v146 = vlaneseq
    %v147 = vshrl.u32 %v146, 7
    %v148 = vsub.s32 0, %v147
    %v149 = vrot.slane %v145, %v148
    %vm150 = vcmp.eq.s32.totalorder %v149, %v143
    %vm151 = vcmp.eq.s32.totalorder %v149, %v144
    %v152 = vsel %vm150, 1, 0
    %v153 = vsel %vm151, 1, 0
    %v154 = vcvt.s32.f32 %v152
    %v155 = vcvt.s32.f32 %v153
    %v156 = vld [vmem:[%s5] sm:$0xff]
    %v157 = vld [vmem:[%s5 + $0x8] sm:$0xff]
    %v158 = vld [vmem:[%s5 + $0x10] sm:$0xff]
    %v159 = vld [vmem:[%s5 + $0x18] sm:$0xff]
    %vm160 = vcmask 261120
    %v162 = vsel %vm160, %v123, 0
    %v165 = vsel %vm160, %v124, 0
    %167 = vmatprep.subr.mxu0 0.0
    %168 = vmatpush1.msra.mxu0 0.0
    %169 = vmatprep.subr.mxu0 0.0
    %170 = vmatpush1.msra.mxu0 0.0
    %171 = vmatprep.subr.mxu0 0.0
    %172 = vmatpush1.msra.mxu0 0.0
    %173 = vmatprep.subr.mxu0 0.0
    %174 = vmatpush1.msra.mxu0 0.0
    %175 = vmatprep.subr.mxu0 0.0
    %176 = vmatpush1.msra.mxu0 0.0
    %177 = vmatprep.subr.mxu0 0.0
    %178 = vmatpush1.msra.mxu0 0.0
    %179 = vmatprep.subr.mxu0 0.0
    %180 = vmatpush1.msra.mxu0 0.0
    %181 = vmatprep.subr.mxu0 0.0
    %182 = vmatpush1.msra.mxu0 0.0
    %183 = vmatprep.subr.mxu0 0.0
    %184 = vmatpush1.msra.mxu0 0.0
    %185 = vmatprep.subr.mxu0 0.0
    %186 = vmatpush1.msra.mxu0 0.0
    %187 = vmatprep.subr.mxu0 0.0
    %188 = vmatpush1.msra.mxu0 0.0
    %189 = vmatprep.subr.mxu0 0.0
    %190 = vmatpush1.msra.mxu0 0.0
    %191 = vmatprep.subr.mxu0 0.0
    %192 = vmatpush1.msra.mxu0 %v159
    %193 = vmatprep.subr.mxu0 0.0
    %194 = vmatpush1.msra.mxu0 %v158
    %195 = vmatprep.subr.mxu0 0.0
    %196 = vmatpush1.msra.mxu0 %v157
    %197 = vmatprep.subr.mxu0 0.0
    %198 = vmatpush1.msra.mxu0 %v156
    %199 = vmatprep.subr.mxu0 0.0
    %200 = vmatpush2.msra.mxu0 0.0
    %201 = vmatprep.subr.mxu0 0.0
    %202 = vmatpush2.msra.mxu0 0.0
    %203 = vmatprep.subr.mxu0 0.0
    %204 = vmatpush2.msra.mxu0 0.0
    %205 = vmatprep.subr.mxu0 0.0
    %206 = vmatpush2.msra.mxu0 0.0
    %207 = vmatprep.subr.mxu0 0.0
    %208 = vmatpush2.msra.mxu0 0.0
    %209 = vmatprep.subr.mxu0 0.0
    %210 = vmatpush2.msra.mxu0 0.0
    %211 = vmatprep.subr.mxu0 0.0
    %212 = vmatpush2.msra.mxu0 0.0
    %213 = vmatprep.subr.mxu0 0.0
    %214 = vmatpush2.msra.mxu0 0.0
    %215 = vmatprep.subr.mxu0 0.0
    %216 = vmatpush2.msra.mxu0 0.0
    %217 = vmatprep.subr.mxu0 0.0
    %218 = vmatpush2.msra.mxu0 0.0
    %219 = vmatprep.subr.mxu0 0.0
    %220 = vmatpush2.msra.mxu0 0.0
    %221 = vmatprep.subr.mxu0 0.0
    %222 = vmatpush2.msra.mxu0 0.0
    %223 = vmatprep.subr.mxu0 0.0
    %224 = vmatpush2.msra.mxu0 0.0
    %225 = vmatprep.subr.mxu0 0.0
    %226 = vmatpush2.msra.mxu0 0.0
    %227 = vmatprep.subr.mxu0 0.0
    %228 = vmatpush2.msra.mxu0 0.0
    %229 = vmatprep.subr.mxu0 0.0
    %230 = vmatpush2.msra.mxu0 0.0
    %231 = vmatprep.mubr.f32.mxu0 0.0
    %232 = vmatmul.mubr.f32.gmra.mxu0 %v162
    %v233 = vpop.f32.mrf.mxu0
    %v234 = vadd.f32 0.0, %v233
    %v235 = vpop.f32.mrf.mxu0
    %236 = vmatprep.mubr.f32.mxu0 0.0
    %237 = vmatmul.mubr.f32.gmra.mxu0 %v165
    %v238 = vpop.f32.mrf.mxu0
    %v239 = vadd.f32 0.0, %v238
    %v240 = vpop.f32.mrf.mxu0
    %241 = vdwg.mxu0
    %v242 = vld [vmem:[#allocation5] sm:$0xff]
    %v243 = vld [vmem:[#allocation5 + $0x8] sm:$0xff]
    %v244 = vld [vmem:[#allocation5 + $0x10] sm:$0xff]
    %v245 = vld [vmem:[#allocation5 + $0x18] sm:$0xff]
    %v246 = vld [vmem:[%s7] sm:$0x1]
    %v248 = vlaneseq
    %v249 = vshrl.u32 %v248, 7
    %v250 = vsub.s32 0, %v249
    %v251 = vrot.slane %v246, %v250
    %v254 = vsel %vm160, %v125, 0
    %256 = vmatprep.subr.mxu0 0.0
    %257 = vmatpush1.msra.mxu0 0.0
    %258 = vmatprep.subr.mxu0 0.0
    %259 = vmatpush1.msra.mxu0 0.0
    %260 = vmatprep.subr.mxu0 0.0
    %261 = vmatpush1.msra.mxu0 0.0
    %262 = vmatprep.subr.mxu0 0.0
    %263 = vmatpush1.msra.mxu0 0.0
    %264 = vmatprep.subr.mxu0 0.0
    %265 = vmatpush1.msra.mxu0 0.0
    %266 = vmatprep.subr.mxu0 0.0
    %267 = vmatpush1.msra.mxu0 0.0
    %268 = vmatprep.subr.mxu0 0.0
    %269 = vmatpush1.msra.mxu0 0.0
    %270 = vmatprep.subr.mxu0 0.0
    %271 = vmatpush1.msra.mxu0 0.0
    %272 = vmatprep.subr.mxu0 0.0
    %273 = vmatpush1.msra.mxu0 0.0
    %274 = vmatprep.subr.mxu0 0.0
    %275 = vmatpush1.msra.mxu0 0.0
    %276 = vmatprep.subr.mxu0 0.0
    %277 = vmatpush1.msra.mxu0 0.0
    %278 = vmatprep.subr.mxu0 0.0
    %279 = vmatpush1.msra.mxu0 0.0
    %280 = vmatprep.subr.mxu0 0.0
    %281 = vmatpush1.msra.mxu0 %v245
    %282 = vmatprep.subr.mxu0 0.0
    %283 = vmatpush1.msra.mxu0 %v244
    %284 = vmatprep.subr.mxu0 0.0
    %285 = vmatpush1.msra.mxu0 %v243
    %286 = vmatprep.subr.mxu0 0.0
    %287 = vmatpush1.msra.mxu0 %v242
    %288 = vmatprep.subr.mxu0 0.0
    %289 = vmatpush2.msra.mxu0 0.0
    %290 = vmatprep.subr.mxu0 0.0
    %291 = vmatpush2.msra.mxu0 0.0
    %292 = vmatprep.subr.mxu0 0.0
    %293 = vmatpush2.msra.mxu0 0.0
    %294 = vmatprep.subr.mxu0 0.0
    %295 = vmatpush2.msra.mxu0 0.0
    %296 = vmatprep.subr.mxu0 0.0
    %297 = vmatpush2.msra.mxu0 0.0
    %298 = vmatprep.subr.mxu0 0.0
    %299 = vmatpush2.msra.mxu0 0.0
    %300 = vmatprep.subr.mxu0 0.0
    %301 = vmatpush2.msra.mxu0 0.0
    %302 = vmatprep.subr.mxu0 0.0
    %303 = vmatpush2.msra.mxu0 0.0
    %304 = vmatprep.subr.mxu0 0.0
    %305 = vmatpush2.msra.mxu0 0.0
    %306 = vmatprep.subr.mxu0 0.0
    %307 = vmatpush2.msra.mxu0 0.0
    %308 = vmatprep.subr.mxu0 0.0
    %309 = vmatpush2.msra.mxu0 0.0
    %310 = vmatprep.subr.mxu0 0.0
    %311 = vmatpush2.msra.mxu0 0.0
    %312 = vmatprep.subr.mxu0 0.0
    %313 = vmatpush2.msra.mxu0 0.0
    %314 = vmatprep.subr.mxu0 0.0
    %315 = vmatpush2.msra.mxu0 0.0
    %316 = vmatprep.subr.mxu0 0.0
    %317 = vmatpush2.msra.mxu0 0.0
    %318 = vmatprep.subr.mxu0 0.0
    %319 = vmatpush2.msra.mxu0 0.0
    %320 = vmatprep.mubr.f32.mxu0 0.0
    %321 = vmatmul.mubr.f32.gmra.mxu0 %v254
    %v322 = vpop.f32.mrf.mxu0
    %v323 = vadd.f32 %v251, %v322
    %v324 = vpop.f32.mrf.mxu0
    %325 = vdwg.mxu0
    %328 = vrot.lane.b32.xlu0 %v234, 96
    %v329 = vpop.permute.xlu0 %328
    %330 = vrot.lane.b32.xlu0 %v239, 96
    %v331 = vpop.permute.xlu0 %330
    %vm334 = vcmask 130048
    %v336 = vsel %vm334, %v141, 0
    %338 = vmatprep.subr.mxu0 0.0
    %339 = vmatpush1.msra.mxu0 0.0
    %340 = vmatprep.subr.mxu0 0.0
    %341 = vmatpush1.msra.mxu0 0.0
    %342 = vmatprep.subr.mxu0 0.0
    %343 = vmatpush1.msra.mxu0 0.0
    %344 = vmatprep.subr.mxu0 0.0
    %345 = vmatpush1.msra.mxu0 0.0
    %346 = vmatprep.subr.mxu0 0.0
    %347 = vmatpush1.msra.mxu0 0.0
    %348 = vmatprep.subr.mxu0 0.0
    %349 = vmatpush1.msra.mxu0 0.0
    %350 = vmatprep.subr.mxu0 0.0
    %351 = vmatpush1.msra.mxu0 0.0
    %352 = vmatprep.subr.mxu0 0.0
    %353 = vmatpush1.msra.mxu0 0.0
    %354 = vmatprep.subr.mxu0 0.0
    %355 = vmatpush1.msra.mxu0 0.0
    %356 = vmatprep.subr.mxu0 0.0
    %357 = vmatpush1.msra.mxu0 0.0
    %358 = vmatprep.subr.mxu0 0.0
    %359 = vmatpush1.msra.mxu0 0.0
    %360 = vmatprep.subr.mxu0 0.0
    %361 = vmatpush1.msra.mxu0 0.0
    %362 = vmatprep.subr.mxu0 0.0
    %363 = vmatpush1.msra.mxu0 0.0
    %364 = vmatprep.subr.mxu0 0.0
    %365 = vmatpush1.msra.mxu0 0.0
    %366 = vmatprep.subr.mxu0 0.0
    %367 = vmatpush1.msra.mxu0 %v331
    %368 = vmatprep.subr.mxu0 0.0
    %369 = vmatpush1.msra.mxu0 %v329
    %370 = vmatprep.subr.mxu0 0.0
    %371 = vmatpush2.msra.mxu0 0.0
    %372 = vmatprep.subr.mxu0 0.0
    %373 = vmatpush2.msra.mxu0 0.0
    %374 = vmatprep.subr.mxu0 0.0
    %375 = vmatpush2.msra.mxu0 0.0
    %376 = vmatprep.subr.mxu0 0.0
    %377 = vmatpush2.msra.mxu0 0.0
    %378 = vmatprep.subr.mxu0 0.0
    %379 = vmatpush2.msra.mxu0 0.0
    %380 = vmatprep.subr.mxu0 0.0
    %381 = vmatpush2.msra.mxu0 0.0
    %382 = vmatprep.subr.mxu0 0.0
    %383 = vmatpush2.msra.mxu0 0.0
    %384 = vmatprep.subr.mxu0 0.0
    %385 = vmatpush2.msra.mxu0 0.0
    %386 = vmatprep.subr.mxu0 0.0
    %387 = vmatpush2.msra.mxu0 0.0
    %388 = vmatprep.subr.mxu0 0.0
    %389 = vmatpush2.msra.mxu0 0.0
    %390 = vmatprep.subr.mxu0 0.0
    %391 = vmatpush2.msra.mxu0 0.0
    %392 = vmatprep.subr.mxu0 0.0
    %393 = vmatpush2.msra.mxu0 0.0
    %394 = vmatprep.subr.mxu0 0.0
    %395 = vmatpush2.msra.mxu0 0.0
    %396 = vmatprep.subr.mxu0 0.0
    %397 = vmatpush2.msra.mxu0 0.0
    %398 = vmatprep.subr.mxu0 0.0
    %399 = vmatpush2.msra.mxu0 0.0
    %400 = vmatprep.subr.mxu0 0.0
    %401 = vmatpush2.msra.mxu0 0.0
    %402 = vmatprep.mubr.f32.mxu0 0.0
    %403 = vmatmul.mubr.f32.gmra.mxu0 %v336
    %v404 = vpop.f32.mrf.mxu0
    %v405 = vadd.f32 0.0, %v404
    %v406 = vpop.f32.mrf.mxu0
    %407 = vdwg.mxu0
    %v409 = vsel %vm334, %v134, 0
    %411 = vmatprep.subr.mxu0 0.0
    %412 = vmatpush1.msra.mxu0 0.0
    %413 = vmatprep.subr.mxu0 0.0
    %414 = vmatpush1.msra.mxu0 0.0
    %415 = vmatprep.subr.mxu0 0.0
    %416 = vmatpush1.msra.mxu0 0.0
    %417 = vmatprep.subr.mxu0 0.0
    %418 = vmatpush1.msra.mxu0 0.0
    %419 = vmatprep.subr.mxu0 0.0
    %420 = vmatpush1.msra.mxu0 0.0
    %421 = vmatprep.subr.mxu0 0.0
    %422 = vmatpush1.msra.mxu0 0.0
    %423 = vmatprep.subr.mxu0 0.0
    %424 = vmatpush1.msra.mxu0 0.0
    %425 = vmatprep.subr.mxu0 0.0
    %426 = vmatpush1.msra.mxu0 0.0
    %427 = vmatprep.subr.mxu0 0.0
    %428 = vmatpush1.msra.mxu0 0.0
    %429 = vmatprep.subr.mxu0 0.0
    %430 = vmatpush1.msra.mxu0 0.0
    %431 = vmatprep.subr.mxu0 0.0
    %432 = vmatpush1.msra.mxu0 0.0
    %433 = vmatprep.subr.mxu0 0.0
    %434 = vmatpush1.msra.mxu0 0.0
    %435 = vmatprep.subr.mxu0 0.0
    %436 = vmatpush1.msra.mxu0 0.0
    %437 = vmatprep.subr.mxu0 0.0
    %438 = vmatpush1.msra.mxu0 0.0
    %439 = vmatprep.subr.mxu0 0.0
    %440 = vmatpush1.msra.mxu0 %v239
    %441 = vmatprep.subr.mxu0 0.0
    %442 = vmatpush1.msra.mxu0 %v234
    %443 = vmatprep.subr.mxu0 0.0
    %444 = vmatpush2.msra.mxu0 0.0
    %445 = vmatprep.subr.mxu0 0.0
    %446 = vmatpush2.msra.mxu0 0.0
    %447 = vmatprep.subr.mxu0 0.0
    %448 = vmatpush2.msra.mxu0 0.0
    %449 = vmatprep.subr.mxu0 0.0
    %450 = vmatpush2.msra.mxu0 0.0
    %451 = vmatprep.subr.mxu0 0.0
    %452 = vmatpush2.msra.mxu0 0.0
    %453 = vmatprep.subr.mxu0 0.0
    %454 = vmatpush2.msra.mxu0 0.0
    %455 = vmatprep.subr.mxu0 0.0
    %456 = vmatpush2.msra.mxu0 0.0
    %457 = vmatprep.subr.mxu0 0.0
    %458 = vmatpush2.msra.mxu0 0.0
    %459 = vmatprep.subr.mxu0 0.0
    %460 = vmatpush2.msra.mxu0 0.0
    %461 = vmatprep.subr.mxu0 0.0
    %462 = vmatpush2.msra.mxu0 0.0
    %463 = vmatprep.subr.mxu0 0.0
    %464 = vmatpush2.msra.mxu0 0.0
    %465 = vmatprep.subr.mxu0 0.0
    %466 = vmatpush2.msra.mxu0 0.0
    %467 = vmatprep.subr.mxu0 0.0
    %468 = vmatpush2.msra.mxu0 0.0
    %469 = vmatprep.subr.mxu0 0.0
    %470 = vmatpush2.msra.mxu0 0.0
    %471 = vmatprep.subr.mxu0 0.0
    %472 = vmatpush2.msra.mxu0 0.0
    %473 = vmatprep.subr.mxu0 0.0
    %474 = vmatpush2.msra.mxu0 0.0
    %475 = vmatprep.mubr.f32.mxu0 0.0
    %476 = vmatmul.mubr.f32.gmra.mxu0 %v409
    %v477 = vpop.f32.mrf.mxu0
    %v478 = vadd.f32 %v323, %v477
    %v479 = vpop.f32.mrf.mxu0
    %480 = vdwg.mxu0
    %482 = vrot.lane.b32.xlu0 %v323, 96
    %v483 = vpop.permute.xlu0 %482
    %v485 = vadd.f32 %v405, %v483
    %v486 = vadd.s32 %v143, 16
    %v487 = vadd.s32 %v143, 24
    %vm488 = vcmp.eq.s32.totalorder %v143, %v127
    %vm489 = vcmp.eq.s32.totalorder %v144, %v127
    %vm490 = vcmp.eq.s32.totalorder %v486, %v127
    %vm491 = vcmp.eq.s32.totalorder %v487, %v127
    %v492 = vsel %vm488, 1, 0
    %v493 = vsel %vm489, 1, 0
    %v494 = vsel %vm490, 1, 0
    %v495 = vsel %vm491, 1, 0
    %v496 = vcvt.s32.f32 %v492
    %v497 = vcvt.s32.f32 %v493
    %v498 = vcvt.s32.f32 %v494
    %v499 = vcvt.s32.f32 %v495
    %v500 = vadd.s32 %v127, 8
    %vm501 = vcmp.eq.s32.totalorder %v143, %v500
    %vm502 = vcmp.eq.s32.totalorder %v144, %v500
    %vm503 = vcmp.eq.s32.totalorder %v486, %v500
    %vm504 = vcmp.eq.s32.totalorder %v487, %v500
    %v505 = vsel %vm501, 1, 0
    %v506 = vsel %vm502, 1, 0
    %v507 = vsel %vm503, 1, 0
    %v508 = vsel %vm504, 1, 0
    %v509 = vcvt.s32.f32 %v505
    %v510 = vcvt.s32.f32 %v506
    %v511 = vcvt.s32.f32 %v507
    %v512 = vcvt.s32.f32 %v508
    %v513 = vadd.s32 %v127, 16
    %vm514 = vcmp.eq.s32.totalorder %v143, %v513
    %vm515 = vcmp.eq.s32.totalorder %v144, %v513
    %vm516 = vcmp.eq.s32.totalorder %v486, %v513
    %vm517 = vcmp.eq.s32.totalorder %v487, %v513
    %v518 = vsel %vm514, 1, 0
    %v519 = vsel %vm515, 1, 0
    %v520 = vsel %vm516, 1, 0
    %v521 = vsel %vm517, 1, 0
    %v522 = vcvt.s32.f32 %v518
    %v523 = vcvt.s32.f32 %v519
    %v524 = vcvt.s32.f32 %v520
    %v525 = vcvt.s32.f32 %v521
    %v526 = vadd.s32 %v127, 24
    %vm527 = vcmp.eq.s32.totalorder %v143, %v526
    %vm528 = vcmp.eq.s32.totalorder %v144, %v526
    %vm529 = vcmp.eq.s32.totalorder %v486, %v526
    %vm530 = vcmp.eq.s32.totalorder %v487, %v526
    %v531 = vsel %vm527, 1, 0
    %v532 = vsel %vm528, 1, 0
    %v533 = vsel %vm529, 1, 0
    %v534 = vsel %vm530, 1, 0
    %v535 = vcvt.s32.f32 %v531
    %v536 = vcvt.s32.f32 %v532
    %v537 = vcvt.s32.f32 %v533
    %v538 = vcvt.s32.f32 %v534
    %540 = vrot.lane.b32.xlu0 %v478, 120
    %v541 = vpop.permute.xlu0 %540
    %vm543 = vcmask 64512
    %v545 = vsel %vm543, %v509, 0
    %v548 = vsel %vm543, %v510, 0
    %v551 = vsel %vm543, %v511, 0
    %v554 = vsel %vm543, %v512, 0
    %556 = vmatprep.subr.mxu0 0.0
    %557 = vmatpush1.msra.mxu0 0.0
    %558 = vmatprep.subr.mxu0 0.0
    %559 = vmatpush1.msra.mxu0 0.0
    %560 = vmatprep.subr.mxu0 0.0
    %561 = vmatpush1.msra.mxu0 0.0
    %562 = vmatprep.subr.mxu0 0.0
    %563 = vmatpush1.msra.mxu0 0.0
    %564 = vmatprep.subr.mxu0 0.0
    %565 = vmatpush1.msra.mxu0 0.0
    %566 = vmatprep.subr.mxu0 0.0
    %567 = vmatpush1.msra.mxu0 0.0
    %568 = vmatprep.subr.mxu0 0.0
    %569 = vmatpush1.msra.mxu0 0.0
    %570 = vmatprep.subr.mxu0 0.0
    %571 = vmatpush1.msra.mxu0 0.0
    %572 = vmatprep.subr.mxu0 0.0
    %573 = vmatpush1.msra.mxu0 0.0
    %574 = vmatprep.subr.mxu0 0.0
    %575 = vmatpush1.msra.mxu0 0.0
    %576 = vmatprep.subr.mxu0 0.0
    %577 = vmatpush1.msra.mxu0 0.0
    %578 = vmatprep.subr.mxu0 0.0
    %579 = vmatpush1.msra.mxu0 0.0
    %580 = vmatprep.subr.mxu0 0.0
    %581 = vmatpush1.msra.mxu0 0.0
    %582 = vmatprep.subr.mxu0 0.0
    %583 = vmatpush1.msra.mxu0 0.0
    %584 = vmatprep.subr.mxu0 0.0
    %585 = vmatpush1.msra.mxu0 0.0
    %586 = vmatprep.subr.mxu0 0.0
    %587 = vmatpush1.msra.mxu0 %v541
    %588 = vmatprep.subr.mxu0 0.0
    %589 = vmatpush2.msra.mxu0 0.0
    %590 = vmatprep.subr.mxu0 0.0
    %591 = vmatpush2.msra.mxu0 0.0
    %592 = vmatprep.subr.mxu0 0.0
    %593 = vmatpush2.msra.mxu0 0.0
    %594 = vmatprep.subr.mxu0 0.0
    %595 = vmatpush2.msra.mxu0 0.0
    %596 = vmatprep.subr.mxu0 0.0
    %597 = vmatpush2.msra.mxu0 0.0
    %598 = vmatprep.subr.mxu0 0.0
    %599 = vmatpush2.msra.mxu0 0.0
    %600 = vmatprep.subr.mxu0 0.0
    %601 = vmatpush2.msra.mxu0 0.0
    %602 = vmatprep.subr.mxu0 0.0
    %603 = vmatpush2.msra.mxu0 0.0
    %604 = vmatprep.subr.mxu0 0.0
    %605 = vmatpush2.msra.mxu0 0.0
    %606 = vmatprep.subr.mxu0 0.0
    %607 = vmatpush2.msra.mxu0 0.0
    %608 = vmatprep.subr.mxu0 0.0
    %609 = vmatpush2.msra.mxu0 0.0
    %610 = vmatprep.subr.mxu0 0.0
    %611 = vmatpush2.msra.mxu0 0.0
    %612 = vmatprep.subr.mxu0 0.0
    %613 = vmatpush2.msra.mxu0 0.0
    %614 = vmatprep.subr.mxu0 0.0
    %615 = vmatpush2.msra.mxu0 0.0
    %616 = vmatprep.subr.mxu0 0.0
    %617 = vmatpush2.msra.mxu0 0.0
    %618 = vmatprep.subr.mxu0 0.0
    %619 = vmatpush2.msra.mxu0 0.0
    %620 = vmatprep.mubr.f32.mxu0 0.0
    %621 = vmatmul.mubr.f32.gmra.mxu0 %v545
    %v622 = vpop.f32.mrf.mxu0
    %v623 = vadd.f32 0.0, %v622
    %v624 = vpop.f32.mrf.mxu0
    %625 = vmatprep.mubr.f32.mxu0 0.0
    %626 = vmatmul.mubr.f32.gmra.mxu0 %v548
    %v627 = vpop.f32.mrf.mxu0
    %v628 = vadd.f32 0.0, %v627
    %v629 = vpop.f32.mrf.mxu0
    %630 = vmatprep.mubr.f32.mxu0 0.0
    %631 = vmatmul.mubr.f32.gmra.mxu0 %v551
    %v632 = vpop.f32.mrf.mxu0
    %v633 = vadd.f32 0.0, %v632
    %v634 = vpop.f32.mrf.mxu0
    %635 = vmatprep.mubr.f32.mxu0 0.0
    %636 = vmatmul.mubr.f32.gmra.mxu0 %v554
    %v637 = vpop.f32.mrf.mxu0
    %v638 = vadd.f32 0.0, %v637
    %v639 = vpop.f32.mrf.mxu0
    %640 = vdwg.mxu0
    %v642 = vsel %vm543, %v496, 0
    %v645 = vsel %vm543, %v497, 0
    %v648 = vsel %vm543, %v498, 0
    %v651 = vsel %vm543, %v499, 0
    %653 = vmatprep.subr.mxu0 0.0
    %654 = vmatpush1.msra.mxu0 0.0
    %655 = vmatprep.subr.mxu0 0.0
    %656 = vmatpush1.msra.mxu0 0.0
    %657 = vmatprep.subr.mxu0 0.0
    %658 = vmatpush1.msra.mxu0 0.0
    %659 = vmatprep.subr.mxu0 0.0
    %660 = vmatpush1.msra.mxu0 0.0
    %661 = vmatprep.subr.mxu0 0.0
    %662 = vmatpush1.msra.mxu0 0.0
    %663 = vmatprep.subr.mxu0 0.0
    %664 = vmatpush1.msra.mxu0 0.0
    %665 = vmatprep.subr.mxu0 0.0
    %666 = vmatpush1.msra.mxu0 0.0
    %667 = vmatprep.subr.mxu0 0.0
    %668 = vmatpush1.msra.mxu0 0.0
    %669 = vmatprep.subr.mxu0 0.0
    %670 = vmatpush1.msra.mxu0 0.0
    %671 = vmatprep.subr.mxu0 0.0
    %672 = vmatpush1.msra.mxu0 0.0
    %673 = vmatprep.subr.mxu0 0.0
    %674 = vmatpush1.msra.mxu0 0.0
    %675 = vmatprep.subr.mxu0 0.0
    %676 = vmatpush1.msra.mxu0 0.0
    %677 = vmatprep.subr.mxu0 0.0
    %678 = vmatpush1.msra.mxu0 0.0
    %679 = vmatprep.subr.mxu0 0.0
    %680 = vmatpush1.msra.mxu0 0.0
    %681 = vmatprep.subr.mxu0 0.0
    %682 = vmatpush1.msra.mxu0 0.0
    %683 = vmatprep.subr.mxu0 0.0
    %684 = vmatpush1.msra.mxu0 %v478
    %685 = vmatprep.subr.mxu0 0.0
    %686 = vmatpush2.msra.mxu0 0.0
    %687 = vmatprep.subr.mxu0 0.0
    %688 = vmatpush2.msra.mxu0 0.0
    %689 = vmatprep.subr.mxu0 0.0
    %690 = vmatpush2.msra.mxu0 0.0
    %691 = vmatprep.subr.mxu0 0.0
    %692 = vmatpush2.msra.mxu0 0.0
    %693 = vmatprep.subr.mxu0 0.0
    %694 = vmatpush2.msra.mxu0 0.0
    %695 = vmatprep.subr.mxu0 0.0
    %696 = vmatpush2.msra.mxu0 0.0
    %697 = vmatprep.subr.mxu0 0.0
    %698 = vmatpush2.msra.mxu0 0.0
    %699 = vmatprep.subr.mxu0 0.0
    %700 = vmatpush2.msra.mxu0 0.0
    %701 = vmatprep.subr.mxu0 0.0
    %702 = vmatpush2.msra.mxu0 0.0
    %703 = vmatprep.subr.mxu0 0.0
    %704 = vmatpush2.msra.mxu0 0.0
    %705 = vmatprep.subr.mxu0 0.0
    %706 = vmatpush2.msra.mxu0 0.0
    %707 = vmatprep.subr.mxu0 0.0
    %708 = vmatpush2.msra.mxu0 0.0
    %709 = vmatprep.subr.mxu0 0.0
    %710 = vmatpush2.msra.mxu0 0.0
    %711 = vmatprep.subr.mxu0 0.0
    %712 = vmatpush2.msra.mxu0 0.0
    %713 = vmatprep.subr.mxu0 0.0
    %714 = vmatpush2.msra.mxu0 0.0
    %715 = vmatprep.subr.mxu0 0.0
    %716 = vmatpush2.msra.mxu0 0.0
    %717 = vmatprep.mubr.f32.mxu0 0.0
    %718 = vmatmul.mubr.f32.gmra.mxu0 %v642
    %v719 = vpop.f32.mrf.mxu0
    %v720 = vadd.f32 %v623, %v719
    %v721 = vpop.f32.mrf.mxu0
    %722 = vmatprep.mubr.f32.mxu0 0.0
    %723 = vmatmul.mubr.f32.gmra.mxu0 %v645
    %v724 = vpop.f32.mrf.mxu0
    %v725 = vadd.f32 %v628, %v724
    %v726 = vpop.f32.mrf.mxu0
    %727 = vmatprep.mubr.f32.mxu0 0.0
    %728 = vmatmul.mubr.f32.gmra.mxu0 %v648
    %v729 = vpop.f32.mrf.mxu0
    %v730 = vadd.f32 %v633, %v729
    %v731 = vpop.f32.mrf.mxu0
    %732 = vmatprep.mubr.f32.mxu0 0.0
    %733 = vmatmul.mubr.f32.gmra.mxu0 %v651
    %v734 = vpop.f32.mrf.mxu0
    %v735 = vadd.f32 %v638, %v734
    %v736 = vpop.f32.mrf.mxu0
    %737 = vdwg.mxu0
    %738 = vrot.lane.b32.xlu0 %v478, 112
    %v739 = vpop.permute.xlu0 %738
    %v742 = vsel %vm543, %v522, 0
    %v745 = vsel %vm543, %v523, 0
    %v748 = vsel %vm543, %v524, 0
    %v751 = vsel %vm543, %v525, 0
    %753 = vmatprep.subr.mxu0 0.0
    %754 = vmatpush1.msra.mxu0 0.0
    %755 = vmatprep.subr.mxu0 0.0
    %756 = vmatpush1.msra.mxu0 0.0
    %757 = vmatprep.subr.mxu0 0.0
    %758 = vmatpush1.msra.mxu0 0.0
    %759 = vmatprep.subr.mxu0 0.0
    %760 = vmatpush1.msra.mxu0 0.0
    %761 = vmatprep.subr.mxu0 0.0
    %762 = vmatpush1.msra.mxu0 0.0
    %763 = vmatprep.subr.mxu0 0.0
    %764 = vmatpush1.msra.mxu0 0.0
    %765 = vmatprep.subr.mxu0 0.0
    %766 = vmatpush1.msra.mxu0 0.0
    %767 = vmatprep.subr.mxu0 0.0
    %768 = vmatpush1.msra.mxu0 0.0
    %769 = vmatprep.subr.mxu0 0.0
    %770 = vmatpush1.msra.mxu0 0.0
    %771 = vmatprep.subr.mxu0 0.0
    %772 = vmatpush1.msra.mxu0 0.0
    %773 = vmatprep.subr.mxu0 0.0
    %774 = vmatpush1.msra.mxu0 0.0
    %775 = vmatprep.subr.mxu0 0.0
    %776 = vmatpush1.msra.mxu0 0.0
    %777 = vmatprep.subr.mxu0 0.0
    %778 = vmatpush1.msra.mxu0 0.0
    %779 = vmatprep.subr.mxu0 0.0
    %780 = vmatpush1.msra.mxu0 0.0
    %781 = vmatprep.subr.mxu0 0.0
    %782 = vmatpush1.msra.mxu0 0.0
    %783 = vmatprep.subr.mxu0 0.0
    %784 = vmatpush1.msra.mxu0 %v739
    %785 = vmatprep.subr.mxu0 0.0
    %786 = vmatpush2.msra.mxu0 0.0
    %787 = vmatprep.subr.mxu0 0.0
    %788 = vmatpush2.msra.mxu0 0.0
    %789 = vmatprep.subr.mxu0 0.0
    %790 = vmatpush2.msra.mxu0 0.0
    %791 = vmatprep.subr.mxu0 0.0
    %792 = vmatpush2.msra.mxu0 0.0
    %793 = vmatprep.subr.mxu0 0.0
    %794 = vmatpush2.msra.mxu0 0.0
    %795 = vmatprep.subr.mxu0 0.0
    %796 = vmatpush2.msra.mxu0 0.0
    %797 = vmatprep.subr.mxu0 0.0
    %798 = vmatpush2.msra.mxu0 0.0
    %799 = vmatprep.subr.mxu0 0.0
    %800 = vmatpush2.msra.mxu0 0.0
    %801 = vmatprep.subr.mxu0 0.0
    %802 = vmatpush2.msra.mxu0 0.0
    %803 = vmatprep.subr.mxu0 0.0
    %804 = vmatpush2.msra.mxu0 0.0
    %805 = vmatprep.subr.mxu0 0.0
    %806 = vmatpush2.msra.mxu0 0.0
    %807 = vmatprep.subr.mxu0 0.0
    %808 = vmatpush2.msra.mxu0 0.0
    %809 = vmatprep.subr.mxu0 0.0
    %810 = vmatpush2.msra.mxu0 0.0
    %811 = vmatprep.subr.mxu0 0.0
    %812 = vmatpush2.msra.mxu0 0.0
    %813 = vmatprep.subr.mxu0 0.0
    %814 = vmatpush2.msra.mxu0 0.0
    %815 = vmatprep.subr.mxu0 0.0
    %816 = vmatpush2.msra.mxu0 0.0
    %817 = vmatprep.mubr.f32.mxu0 0.0
    %818 = vmatmul.mubr.f32.gmra.mxu0 %v742
    %v819 = vpop.f32.mrf.mxu0
    %v820 = vadd.f32 0.0, %v819
    %v821 = vpop.f32.mrf.mxu0
    %822 = vmatprep.mubr.f32.mxu0 0.0
    %823 = vmatmul.mubr.f32.gmra.mxu0 %v745
    %v824 = vpop.f32.mrf.mxu0
    %v825 = vadd.f32 0.0, %v824
    %v826 = vpop.f32.mrf.mxu0
    %827 = vmatprep.mubr.f32.mxu0 0.0
    %828 = vmatmul.mubr.f32.gmra.mxu0 %v748
    %v829 = vpop.f32.mrf.mxu0
    %v830 = vadd.f32 0.0, %v829
    %v831 = vpop.f32.mrf.mxu0
    %832 = vmatprep.mubr.f32.mxu0 0.0
    %833 = vmatmul.mubr.f32.gmra.mxu0 %v751
    %v834 = vpop.f32.mrf.mxu0
    %v835 = vadd.f32 0.0, %v834
    %v836 = vpop.f32.mrf.mxu0
    %837 = vdwg.mxu0
    %v838 = vadd.f32 %v720, %v820
    %v839 = vadd.f32 %v725, %v825
    %v840 = vadd.f32 %v730, %v830
    %v841 = vadd.f32 %v735, %v835
    %842 = vrot.lane.b32.xlu0 %v478, 104
    %v843 = vpop.permute.xlu0 %842
    %v846 = vsel %vm543, %v535, 0
    %v849 = vsel %vm543, %v536, 0
    %v852 = vsel %vm543, %v537, 0
    %v855 = vsel %vm543, %v538, 0
    %857 = vmatprep.subr.mxu0 0.0
    %858 = vmatpush1.msra.mxu0 0.0
    %859 = vmatprep.subr.mxu0 0.0
    %860 = vmatpush1.msra.mxu0 0.0
    %861 = vmatprep.subr.mxu0 0.0
    %862 = vmatpush1.msra.mxu0 0.0
    %863 = vmatprep.subr.mxu0 0.0
    %864 = vmatpush1.msra.mxu0 0.0
    %865 = vmatprep.subr.mxu0 0.0
    %866 = vmatpush1.msra.mxu0 0.0
    %867 = vmatprep.subr.mxu0 0.0
    %868 = vmatpush1.msra.mxu0 0.0
    %869 = vmatprep.subr.mxu0 0.0
    %870 = vmatpush1.msra.mxu0 0.0
    %871 = vmatprep.subr.mxu0 0.0
    %872 = vmatpush1.msra.mxu0 0.0
    %873 = vmatprep.subr.mxu0 0.0
    %874 = vmatpush1.msra.mxu0 0.0
    %875 = vmatprep.subr.mxu0 0.0
    %876 = vmatpush1.msra.mxu0 0.0
    %877 = vmatprep.subr.mxu0 0.0
    %878 = vmatpush1.msra.mxu0 0.0
    %879 = vmatprep.subr.mxu0 0.0
    %880 = vmatpush1.msra.mxu0 0.0
    %881 = vmatprep.subr.mxu0 0.0
    %882 = vmatpush1.msra.mxu0 0.0
    %883 = vmatprep.subr.mxu0 0.0
    %884 = vmatpush1.msra.mxu0 0.0
    %885 = vmatprep.subr.mxu0 0.0
    %886 = vmatpush1.msra.mxu0 0.0
    %887 = vmatprep.subr.mxu0 0.0
    %888 = vmatpush1.msra.mxu0 %v843
    %889 = vmatprep.subr.mxu0 0.0
    %890 = vmatpush2.msra.mxu0 0.0
    %891 = vmatprep.subr.mxu0 0.0
    %892 = vmatpush2.msra.mxu0 0.0
    %893 = vmatprep.subr.mxu0 0.0
    %894 = vmatpush2.msra.mxu0 0.0
    %895 = vmatprep.subr.mxu0 0.0
    %896 = vmatpush2.msra.mxu0 0.0
    %897 = vmatprep.subr.mxu0 0.0
    %898 = vmatpush2.msra.mxu0 0.0
    %899 = vmatprep.subr.mxu0 0.0
    %900 = vmatpush2.msra.mxu0 0.0
    %901 = vmatprep.subr.mxu0 0.0
    %902 = vmatpush2.msra.mxu0 0.0
    %903 = vmatprep.subr.mxu0 0.0
    %904 = vmatpush2.msra.mxu0 0.0
    %905 = vmatprep.subr.mxu0 0.0
    %906 = vmatpush2.msra.mxu0 0.0
    %907 = vmatprep.subr.mxu0 0.0
    %908 = vmatpush2.msra.mxu0 0.0
    %909 = vmatprep.subr.mxu0 0.0
    %910 = vmatpush2.msra.mxu0 0.0
    %911 = vmatprep.subr.mxu0 0.0
    %912 = vmatpush2.msra.mxu0 0.0
    %913 = vmatprep.subr.mxu0 0.0
    %914 = vmatpush2.msra.mxu0 0.0
    %915 = vmatprep.subr.mxu0 0.0
    %916 = vmatpush2.msra.mxu0 0.0
    %917 = vmatprep.subr.mxu0 0.0
    %918 = vmatpush2.msra.mxu0 0.0
    %919 = vmatprep.subr.mxu0 0.0
    %920 = vmatpush2.msra.mxu0 0.0
    %921 = vmatprep.mubr.f32.mxu0 0.0
    %922 = vmatmul.mubr.f32.gmra.mxu0 %v846
    %v923 = vpop.f32.mrf.mxu0
    %v924 = vadd.f32 0.0, %v923
    %v925 = vpop.f32.mrf.mxu0
    %926 = vmatprep.mubr.f32.mxu0 0.0
    %927 = vmatmul.mubr.f32.gmra.mxu0 %v849
    %v928 = vpop.f32.mrf.mxu0
    %v929 = vadd.f32 0.0, %v928
    %v930 = vpop.f32.mrf.mxu0
    %931 = vmatprep.mubr.f32.mxu0 0.0
    %932 = vmatmul.mubr.f32.gmra.mxu0 %v852
    %v933 = vpop.f32.mrf.mxu0
    %v934 = vadd.f32 0.0, %v933
    %v935 = vpop.f32.mrf.mxu0
    %936 = vmatprep.mubr.f32.mxu0 0.0
    %937 = vmatmul.mubr.f32.gmra.mxu0 %v855
    %v938 = vpop.f32.mrf.mxu0
    %v939 = vadd.f32 0.0, %v938
    %v940 = vpop.f32.mrf.mxu0
    %941 = vdwg.mxu0
    %v942 = vadd.f32 %v838, %v924
    %v943 = vadd.f32 %v839, %v929
    %v944 = vadd.f32 %v840, %v934
    %v945 = vadd.f32 %v841, %v939
    %947 = vrot.lane.b32.xlu0 %v485, 120
    %v948 = vpop.permute.xlu0 %947
    %950 = vmatprep.subr.mxu0 0.0
    %951 = vmatpush1.msra.mxu0 0.0
    %952 = vmatprep.subr.mxu0 0.0
    %953 = vmatpush1.msra.mxu0 0.0
    %954 = vmatprep.subr.mxu0 0.0
    %955 = vmatpush1.msra.mxu0 0.0
    %956 = vmatprep.subr.mxu0 0.0
    %957 = vmatpush1.msra.mxu0 0.0
    %958 = vmatprep.subr.mxu0 0.0
    %959 = vmatpush1.msra.mxu0 0.0
    %960 = vmatprep.subr.mxu0 0.0
    %961 = vmatpush1.msra.mxu0 0.0
    %962 = vmatprep.subr.mxu0 0.0
    %963 = vmatpush1.msra.mxu0 0.0
    %964 = vmatprep.subr.mxu0 0.0
    %965 = vmatpush1.msra.mxu0 0.0
    %966 = vmatprep.subr.mxu0 0.0
    %967 = vmatpush1.msra.mxu0 0.0
    %968 = vmatprep.subr.mxu0 0.0
    %969 = vmatpush1.msra.mxu0 0.0
    %970 = vmatprep.subr.mxu0 0.0
    %971 = vmatpush1.msra.mxu0 0.0
    %972 = vmatprep.subr.mxu0 0.0
    %973 = vmatpush1.msra.mxu0 0.0
    %974 = vmatprep.subr.mxu0 0.0
    %975 = vmatpush1.msra.mxu0 0.0
    %976 = vmatprep.subr.mxu0 0.0
    %977 = vmatpush1.msra.mxu0 0.0
    %978 = vmatprep.subr.mxu0 0.0
    %979 = vmatpush1.msra.mxu0 0.0
    %980 = vmatprep.subr.mxu0 0.0
    %981 = vmatpush1.msra.mxu0 %v948
    %982 = vmatprep.subr.mxu0 0.0
    %983 = vmatpush2.msra.mxu0 0.0
    %984 = vmatprep.subr.mxu0 0.0
    %985 = vmatpush2.msra.mxu0 0.0
    %986 = vmatprep.subr.mxu0 0.0
    %987 = vmatpush2.msra.mxu0 0.0
    %988 = vmatprep.subr.mxu0 0.0
    %989 = vmatpush2.msra.mxu0 0.0
    %990 = vmatprep.subr.mxu0 0.0
    %991 = vmatpush2.msra.mxu0 0.0
    %992 = vmatprep.subr.mxu0 0.0
    %993 = vmatpush2.msra.mxu0 0.0
    %994 = vmatprep.subr.mxu0 0.0
    %995 = vmatpush2.msra.mxu0 0.0
    %996 = vmatprep.subr.mxu0 0.0
    %997 = vmatpush2.msra.mxu0 0.0
    %998 = vmatprep.subr.mxu0 0.0
    %999 = vmatpush2.msra.mxu0 0.0
    %1000 = vmatprep.subr.mxu0 0.0
    %1001 = vmatpush2.msra.mxu0 0.0
    %1002 = vmatprep.subr.mxu0 0.0
    %1003 = vmatpush2.msra.mxu0 0.0
    %1004 = vmatprep.subr.mxu0 0.0
    %1005 = vmatpush2.msra.mxu0 0.0
    %1006 = vmatprep.subr.mxu0 0.0
    %1007 = vmatpush2.msra.mxu0 0.0
    %1008 = vmatprep.subr.mxu0 0.0
    %1009 = vmatpush2.msra.mxu0 0.0
    %1010 = vmatprep.subr.mxu0 0.0
    %1011 = vmatpush2.msra.mxu0 0.0
    %1012 = vmatprep.subr.mxu0 0.0
    %1013 = vmatpush2.msra.mxu0 0.0
    %1014 = vmatprep.mubr.f32.mxu0 0.0
    %1015 = vmatmul.mubr.f32.gmra.mxu0 %v545
    %v1016 = vpop.f32.mrf.mxu0
    %v1017 = vadd.f32 0.0, %v1016
    %v1018 = vpop.f32.mrf.mxu0
    %1019 = vmatprep.mubr.f32.mxu0 0.0
    %1020 = vmatmul.mubr.f32.gmra.mxu0 %v548
    %v1021 = vpop.f32.mrf.mxu0
    %v1022 = vadd.f32 0.0, %v1021
    %v1023 = vpop.f32.mrf.mxu0
    %1024 = vmatprep.mubr.f32.mxu0 0.0
    %1025 = vmatmul.mubr.f32.gmra.mxu0 %v551
    %v1026 = vpop.f32.mrf.mxu0
    %v1027 = vadd.f32 0.0, %v1026
    %v1028 = vpop.f32.mrf.mxu0
    %1029 = vmatprep.mubr.f32.mxu0 0.0
    %1030 = vmatmul.mubr.f32.gmra.mxu0 %v554
    %v1031 = vpop.f32.mrf.mxu0
    %v1032 = vadd.f32 0.0, %v1031
    %v1033 = vpop.f32.mrf.mxu0
    %1034 = vdwg.mxu0
    %1035 = vmatprep.subr.mxu0 0.0
    %1036 = vmatpush1.msra.mxu0 0.0
    %1037 = vmatprep.subr.mxu0 0.0
    %1038 = vmatpush1.msra.mxu0 0.0
    %1039 = vmatprep.subr.mxu0 0.0
    %1040 = vmatpush1.msra.mxu0 0.0
    %1041 = vmatprep.subr.mxu0 0.0
    %1042 = vmatpush1.msra.mxu0 0.0
    %1043 = vmatprep.subr.mxu0 0.0
    %1044 = vmatpush1.msra.mxu0 0.0
    %1045 = vmatprep.subr.mxu0 0.0
    %1046 = vmatpush1.msra.mxu0 0.0
    %1047 = vmatprep.subr.mxu0 0.0
    %1048 = vmatpush1.msra.mxu0 0.0
    %1049 = vmatprep.subr.mxu0 0.0
    %1050 = vmatpush1.msra.mxu0 0.0
    %1051 = vmatprep.subr.mxu0 0.0
    %1052 = vmatpush1.msra.mxu0 0.0
    %1053 = vmatprep.subr.mxu0 0.0
    %1054 = vmatpush1.msra.mxu0 0.0
    %1055 = vmatprep.subr.mxu0 0.0
    %1056 = vmatpush1.msra.mxu0 0.0
    %1057 = vmatprep.subr.mxu0 0.0
    %1058 = vmatpush1.msra.mxu0 0.0
    %1059 = vmatprep.subr.mxu0 0.0
    %1060 = vmatpush1.msra.mxu0 0.0
    %1061 = vmatprep.subr.mxu0 0.0
    %1062 = vmatpush1.msra.mxu0 0.0
    %1063 = vmatprep.subr.mxu0 0.0
    %1064 = vmatpush1.msra.mxu0 0.0
    %1065 = vmatprep.subr.mxu0 0.0
    %1066 = vmatpush1.msra.mxu0 %v485
    %1067 = vmatprep.subr.mxu0 0.0
    %1068 = vmatpush2.msra.mxu0 0.0
    %1069 = vmatprep.subr.mxu0 0.0
    %1070 = vmatpush2.msra.mxu0 0.0
    %1071 = vmatprep.subr.mxu0 0.0
    %1072 = vmatpush2.msra.mxu0 0.0
    %1073 = vmatprep.subr.mxu0 0.0
    %1074 = vmatpush2.msra.mxu0 0.0
    %1075 = vmatprep.subr.mxu0 0.0
    %1076 = vmatpush2.msra.mxu0 0.0
    %1077 = vmatprep.subr.mxu0 0.0
    %1078 = vmatpush2.msra.mxu0 0.0
    %1079 = vmatprep.subr.mxu0 0.0
    %1080 = vmatpush2.msra.mxu0 0.0
    %1081 = vmatprep.subr.mxu0 0.0
    %1082 = vmatpush2.msra.mxu0 0.0
    %1083 = vmatprep.subr.mxu0 0.0
    %1084 = vmatpush2.msra.mxu0 0.0
    %1085 = vmatprep.subr.mxu0 0.0
    %1086 = vmatpush2.msra.mxu0 0.0
    %1087 = vmatprep.subr.mxu0 0.0
    %1088 = vmatpush2.msra.mxu0 0.0
    %1089 = vmatprep.subr.mxu0 0.0
    %1090 = vmatpush2.msra.mxu0 0.0
    %1091 = vmatprep.subr.mxu0 0.0
    %1092 = vmatpush2.msra.mxu0 0.0
    %1093 = vmatprep.subr.mxu0 0.0
    %1094 = vmatpush2.msra.mxu0 0.0
    %1095 = vmatprep.subr.mxu0 0.0
    %1096 = vmatpush2.msra.mxu0 0.0
    %1097 = vmatprep.subr.mxu0 0.0
    %1098 = vmatpush2.msra.mxu0 0.0
    %1099 = vmatprep.mubr.f32.mxu0 0.0
    %1100 = vmatmul.mubr.f32.gmra.mxu0 %v642
    %v1101 = vpop.f32.mrf.mxu0
    %v1102 = vadd.f32 %v1017, %v1101
    %v1103 = vpop.f32.mrf.mxu0
    %1104 = vmatprep.mubr.f32.mxu0 0.0
    %1105 = vmatmul.mubr.f32.gmra.mxu0 %v645
    %v1106 = vpop.f32.mrf.mxu0
    %v1107 = vadd.f32 %v1022, %v1106
    %v1108 = vpop.f32.mrf.mxu0
    %1109 = vmatprep.mubr.f32.mxu0 0.0
    %1110 = vmatmul.mubr.f32.gmra.mxu0 %v648
    %v1111 = vpop.f32.mrf.mxu0
    %v1112 = vadd.f32 %v1027, %v1111
    %v1113 = vpop.f32.mrf.mxu0
    %1114 = vmatprep.mubr.f32.mxu0 0.0
    %1115 = vmatmul.mubr.f32.gmra.mxu0 %v651
    %v1116 = vpop.f32.mrf.mxu0
    %v1117 = vadd.f32 %v1032, %v1116
    %v1118 = vpop.f32.mrf.mxu0
    %1119 = vdwg.mxu0
    %1120 = vrot.lane.b32.xlu0 %v485, 112
    %v1121 = vpop.permute.xlu0 %1120
    %1123 = vmatprep.subr.mxu0 0.0
    %1124 = vmatpush1.msra.mxu0 0.0
    %1125 = vmatprep.subr.mxu0 0.0
    %1126 = vmatpush1.msra.mxu0 0.0
    %1127 = vmatprep.subr.mxu0 0.0
    %1128 = vmatpush1.msra.mxu0 0.0
    %1129 = vmatprep.subr.mxu0 0.0
    %1130 = vmatpush1.msra.mxu0 0.0
    %1131 = vmatprep.subr.mxu0 0.0
    %1132 = vmatpush1.msra.mxu0 0.0
    %1133 = vmatprep.subr.mxu0 0.0
    %1134 = vmatpush1.msra.mxu0 0.0
    %1135 = vmatprep.subr.mxu0 0.0
    %1136 = vmatpush1.msra.mxu0 0.0
    %1137 = vmatprep.subr.mxu0 0.0
    %1138 = vmatpush1.msra.mxu0 0.0
    %1139 = vmatprep.subr.mxu0 0.0
    %1140 = vmatpush1.msra.mxu0 0.0
    %1141 = vmatprep.subr.mxu0 0.0
    %1142 = vmatpush1.msra.mxu0 0.0
    %1143 = vmatprep.subr.mxu0 0.0
    %1144 = vmatpush1.msra.mxu0 0.0
    %1145 = vmatprep.subr.mxu0 0.0
    %1146 = vmatpush1.msra.mxu0 0.0
    %1147 = vmatprep.subr.mxu0 0.0
    %1148 = vmatpush1.msra.mxu0 0.0
    %1149 = vmatprep.subr.mxu0 0.0
    %1150 = vmatpush1.msra.mxu0 0.0
    %1151 = vmatprep.subr.mxu0 0.0
    %1152 = vmatpush1.msra.mxu0 0.0
    %1153 = vmatprep.subr.mxu0 0.0
    %1154 = vmatpush1.msra.mxu0 %v1121
    %1155 = vmatprep.subr.mxu0 0.0
    %1156 = vmatpush2.msra.mxu0 0.0
    %1157 = vmatprep.subr.mxu0 0.0
    %1158 = vmatpush2.msra.mxu0 0.0
    %1159 = vmatprep.subr.mxu0 0.0
    %1160 = vmatpush2.msra.mxu0 0.0
    %1161 = vmatprep.subr.mxu0 0.0
    %1162 = vmatpush2.msra.mxu0 0.0
    %1163 = vmatprep.subr.mxu0 0.0
    %1164 = vmatpush2.msra.mxu0 0.0
    %1165 = vmatprep.subr.mxu0 0.0
    %1166 = vmatpush2.msra.mxu0 0.0
    %1167 = vmatprep.subr.mxu0 0.0
    %1168 = vmatpush2.msra.mxu0 0.0
    %1169 = vmatprep.subr.mxu0 0.0
    %1170 = vmatpush2.msra.mxu0 0.0
    %1171 = vmatprep.subr.mxu0 0.0
    %1172 = vmatpush2.msra.mxu0 0.0
    %1173 = vmatprep.subr.mxu0 0.0
    %1174 = vmatpush2.msra.mxu0 0.0
    %1175 = vmatprep.subr.mxu0 0.0
    %1176 = vmatpush2.msra.mxu0 0.0
    %1177 = vmatprep.subr.mxu0 0.0
    %1178 = vmatpush2.msra.mxu0 0.0
    %1179 = vmatprep.subr.mxu0 0.0
    %1180 = vmatpush2.msra.mxu0 0.0
    %1181 = vmatprep.subr.mxu0 0.0
    %1182 = vmatpush2.msra.mxu0 0.0
    %1183 = vmatprep.subr.mxu0 0.0
    %1184 = vmatpush2.msra.mxu0 0.0
    %1185 = vmatprep.subr.mxu0 0.0
    %1186 = vmatpush2.msra.mxu0 0.0
    %1187 = vmatprep.mubr.f32.mxu0 0.0
    %1188 = vmatmul.mubr.f32.gmra.mxu0 %v742
    %v1189 = vpop.f32.mrf.mxu0
    %v1190 = vadd.f32 0.0, %v1189
    %v1191 = vpop.f32.mrf.mxu0
    %1192 = vmatprep.mubr.f32.mxu0 0.0
    %1193 = vmatmul.mubr.f32.gmra.mxu0 %v745
    %v1194 = vpop.f32.mrf.mxu0
    %v1195 = vadd.f32 0.0, %v1194
    %v1196 = vpop.f32.mrf.mxu0
    %1197 = vmatprep.mubr.f32.mxu0 0.0
    %1198 = vmatmul.mubr.f32.gmra.mxu0 %v748
    %v1199 = vpop.f32.mrf.mxu0
    %v1200 = vadd.f32 0.0, %v1199
    %v1201 = vpop.f32.mrf.mxu0
    %1202 = vmatprep.mubr.f32.mxu0 0.0
    %1203 = vmatmul.mubr.f32.gmra.mxu0 %v751
    %v1204 = vpop.f32.mrf.mxu0
    %v1205 = vadd.f32 0.0, %v1204
    %v1206 = vpop.f32.mrf.mxu0
    %1207 = vdwg.mxu0
    %v1208 = vadd.f32 %v1102, %v1190
    %v1209 = vadd.f32 %v1107, %v1195
    %v1210 = vadd.f32 %v1112, %v1200
    %v1211 = vadd.f32 %v1117, %v1205
    %1212 = vrot.lane.b32.xlu0 %v485, 104
    %v1213 = vpop.permute.xlu0 %1212
    %1215 = vmatprep.subr.mxu0 0.0
    %1216 = vmatpush1.msra.mxu0 0.0
    %1217 = vmatprep.subr.mxu0 0.0
    %1218 = vmatpush1.msra.mxu0 0.0
    %1219 = vmatprep.subr.mxu0 0.0
    %1220 = vmatpush1.msra.mxu0 0.0
    %1221 = vmatprep.subr.mxu0 0.0
    %1222 = vmatpush1.msra.mxu0 0.0
    %1223 = vmatprep.subr.mxu0 0.0
    %1224 = vmatpush1.msra.mxu0 0.0
    %1225 = vmatprep.subr.mxu0 0.0
    %1226 = vmatpush1.msra.mxu0 0.0
    %1227 = vmatprep.subr.mxu0 0.0
    %1228 = vmatpush1.msra.mxu0 0.0
    %1229 = vmatprep.subr.mxu0 0.0
    %1230 = vmatpush1.msra.mxu0 0.0
    %1231 = vmatprep.subr.mxu0 0.0
    %1232 = vmatpush1.msra.mxu0 0.0
    %1233 = vmatprep.subr.mxu0 0.0
    %1234 = vmatpush1.msra.mxu0 0.0
    %1235 = vmatprep.subr.mxu0 0.0
    %1236 = vmatpush1.msra.mxu0 0.0
    %1237 = vmatprep.subr.mxu0 0.0
    %1238 = vmatpush1.msra.mxu0 0.0
    %1239 = vmatprep.subr.mxu0 0.0
    %1240 = vmatpush1.msra.mxu0 0.0
    %1241 = vmatprep.subr.mxu0 0.0
    %1242 = vmatpush1.msra.mxu0 0.0
    %1243 = vmatprep.subr.mxu0 0.0
    %1244 = vmatpush1.msra.mxu0 0.0
    %1245 = vmatprep.subr.mxu0 0.0
    %1246 = vmatpush1.msra.mxu0 %v1213
    %1247 = vmatprep.subr.mxu0 0.0
    %1248 = vmatpush2.msra.mxu0 0.0
    %1249 = vmatprep.subr.mxu0 0.0
    %1250 = vmatpush2.msra.mxu0 0.0
    %1251 = vmatprep.subr.mxu0 0.0
    %1252 = vmatpush2.msra.mxu0 0.0
    %1253 = vmatprep.subr.mxu0 0.0
    %1254 = vmatpush2.msra.mxu0 0.0
    %1255 = vmatprep.subr.mxu0 0.0
    %1256 = vmatpush2.msra.mxu0 0.0
    %1257 = vmatprep.subr.mxu0 0.0
    %1258 = vmatpush2.msra.mxu0 0.0
    %1259 = vmatprep.subr.mxu0 0.0
    %1260 = vmatpush2.msra.mxu0 0.0
    %1261 = vmatprep.subr.mxu0 0.0
    %1262 = vmatpush2.msra.mxu0 0.0
    %1263 = vmatprep.subr.mxu0 0.0
    %1264 = vmatpush2.msra.mxu0 0.0
    %1265 = vmatprep.subr.mxu0 0.0
    %1266 = vmatpush2.msra.mxu0 0.0
    %1267 = vmatprep.subr.mxu0 0.0
    %1268 = vmatpush2.msra.mxu0 0.0
    %1269 = vmatprep.subr.mxu0 0.0
    %1270 = vmatpush2.msra.mxu0 0.0
    %1271 = vmatprep.subr.mxu0 0.0
    %1272 = vmatpush2.msra.mxu0 0.0
    %1273 = vmatprep.subr.mxu0 0.0
    %1274 = vmatpush2.msra.mxu0 0.0
    %1275 = vmatprep.subr.mxu0 0.0
    %1276 = vmatpush2.msra.mxu0 0.0
    %1277 = vmatprep.subr.mxu0 0.0
    %1278 = vmatpush2.msra.mxu0 0.0
    %1279 = vmatprep.mubr.f32.mxu0 0.0
    %1280 = vmatmul.mubr.f32.gmra.mxu0 %v846
    %v1281 = vpop.f32.mrf.mxu0
    %v1282 = vadd.f32 0.0, %v1281
    %v1283 = vpop.f32.mrf.mxu0
    %1284 = vmatprep.mubr.f32.mxu0 0.0
    %1285 = vmatmul.mubr.f32.gmra.mxu0 %v849
    %v1286 = vpop.f32.mrf.mxu0
    %v1287 = vadd.f32 0.0, %v1286
    %v1288 = vpop.f32.mrf.mxu0
    %1289 = vmatprep.mubr.f32.mxu0 0.0
    %1290 = vmatmul.mubr.f32.gmra.mxu0 %v852
    %v1291 = vpop.f32.mrf.mxu0
    %v1292 = vadd.f32 0.0, %v1291
    %v1293 = vpop.f32.mrf.mxu0
    %1294 = vmatprep.mubr.f32.mxu0 0.0
    %1295 = vmatmul.mubr.f32.gmra.mxu0 %v855
    %v1296 = vpop.f32.mrf.mxu0
    %v1297 = vadd.f32 0.0, %v1296
    %v1298 = vpop.f32.mrf.mxu0
    %1299 = vdwg.mxu0
    %v1300 = vadd.f32 %v1208, %v1282
    %v1301 = vadd.f32 %v1209, %v1287
    %v1302 = vadd.f32 %v1210, %v1292
    %v1303 = vadd.f32 %v1211, %v1297
    %1304 = vrot.lane.b32.xlu0 %v485, 88
    %v1305 = vpop.permute.xlu0 %1304
    %1307 = vmatprep.subr.mxu0 0.0
    %1308 = vmatpush1.msra.mxu0 0.0
    %1309 = vmatprep.subr.mxu0 0.0
    %1310 = vmatpush1.msra.mxu0 0.0
    %1311 = vmatprep.subr.mxu0 0.0
    %1312 = vmatpush1.msra.mxu0 0.0
    %1313 = vmatprep.subr.mxu0 0.0
    %1314 = vmatpush1.msra.mxu0 0.0
    %1315 = vmatprep.subr.mxu0 0.0
    %1316 = vmatpush1.msra.mxu0 0.0
    %1317 = vmatprep.subr.mxu0 0.0
    %1318 = vmatpush1.msra.mxu0 0.0
    %1319 = vmatprep.subr.mxu0 0.0
    %1320 = vmatpush1.msra.mxu0 0.0
    %1321 = vmatprep.subr.mxu0 0.0
    %1322 = vmatpush1.msra.mxu0 0.0
    %1323 = vmatprep.subr.mxu0 0.0
    %1324 = vmatpush1.msra.mxu0 0.0
    %1325 = vmatprep.subr.mxu0 0.0
    %1326 = vmatpush1.msra.mxu0 0.0
    %1327 = vmatprep.subr.mxu0 0.0
    %1328 = vmatpush1.msra.mxu0 0.0
    %1329 = vmatprep.subr.mxu0 0.0
    %1330 = vmatpush1.msra.mxu0 0.0
    %1331 = vmatprep.subr.mxu0 0.0
    %1332 = vmatpush1.msra.mxu0 0.0
    %1333 = vmatprep.subr.mxu0 0.0
    %1334 = vmatpush1.msra.mxu0 0.0
    %1335 = vmatprep.subr.mxu0 0.0
    %1336 = vmatpush1.msra.mxu0 0.0
    %1337 = vmatprep.subr.mxu0 0.0
    %1338 = vmatpush1.msra.mxu0 %v1305
    %1339 = vmatprep.subr.mxu0 0.0
    %1340 = vmatpush2.msra.mxu0 0.0
    %1341 = vmatprep.subr.mxu0 0.0
    %1342 = vmatpush2.msra.mxu0 0.0
    %1343 = vmatprep.subr.mxu0 0.0
    %1344 = vmatpush2.msra.mxu0 0.0
    %1345 = vmatprep.subr.mxu0 0.0
    %1346 = vmatpush2.msra.mxu0 0.0
    %1347 = vmatprep.subr.mxu0 0.0
    %1348 = vmatpush2.msra.mxu0 0.0
    %1349 = vmatprep.subr.mxu0 0.0
    %1350 = vmatpush2.msra.mxu0 0.0
    %1351 = vmatprep.subr.mxu0 0.0
    %1352 = vmatpush2.msra.mxu0 0.0
    %1353 = vmatprep.subr.mxu0 0.0
    %1354 = vmatpush2.msra.mxu0 0.0
    %1355 = vmatprep.subr.mxu0 0.0
    %1356 = vmatpush2.msra.mxu0 0.0
    %1357 = vmatprep.subr.mxu0 0.0
    %1358 = vmatpush2.msra.mxu0 0.0
    %1359 = vmatprep.subr.mxu0 0.0
    %1360 = vmatpush2.msra.mxu0 0.0
    %1361 = vmatprep.subr.mxu0 0.0
    %1362 = vmatpush2.msra.mxu0 0.0
    %1363 = vmatprep.subr.mxu0 0.0
    %1364 = vmatpush2.msra.mxu0 0.0
    %1365 = vmatprep.subr.mxu0 0.0
    %1366 = vmatpush2.msra.mxu0 0.0
    %1367 = vmatprep.subr.mxu0 0.0
    %1368 = vmatpush2.msra.mxu0 0.0
    %1369 = vmatprep.subr.mxu0 0.0
    %1370 = vmatpush2.msra.mxu0 0.0
    %1371 = vmatprep.mubr.f32.mxu0 0.0
    %1372 = vmatmul.mubr.f32.gmra.mxu0 %v545
    %v1373 = vpop.f32.mrf.mxu0
    %v1374 = vadd.f32 0.0, %v1373
    %v1375 = vpop.f32.mrf.mxu0
    %1376 = vmatprep.mubr.f32.mxu0 0.0
    %1377 = vmatmul.mubr.f32.gmra.mxu0 %v548
    %v1378 = vpop.f32.mrf.mxu0
    %v1379 = vadd.f32 0.0, %v1378
    %v1380 = vpop.f32.mrf.mxu0
    %1381 = vmatprep.mubr.f32.mxu0 0.0
    %1382 = vmatmul.mubr.f32.gmra.mxu0 %v551
    %v1383 = vpop.f32.mrf.mxu0
    %v1384 = vadd.f32 0.0, %v1383
    %v1385 = vpop.f32.mrf.mxu0
    %1386 = vmatprep.mubr.f32.mxu0 0.0
    %1387 = vmatmul.mubr.f32.gmra.mxu0 %v554
    %v1388 = vpop.f32.mrf.mxu0
    %v1389 = vadd.f32 0.0, %v1388
    %v1390 = vpop.f32.mrf.mxu0
    %1391 = vdwg.mxu0
    %1392 = vrot.lane.b32.xlu0 %v485, 96
    %v1393 = vpop.permute.xlu0 %1392
    %1395 = vmatprep.subr.mxu0 0.0
    %1396 = vmatpush1.msra.mxu0 0.0
    %1397 = vmatprep.subr.mxu0 0.0
    %1398 = vmatpush1.msra.mxu0 0.0
    %1399 = vmatprep.subr.mxu0 0.0
    %1400 = vmatpush1.msra.mxu0 0.0
    %1401 = vmatprep.subr.mxu0 0.0
    %1402 = vmatpush1.msra.mxu0 0.0
    %1403 = vmatprep.subr.mxu0 0.0
    %1404 = vmatpush1.msra.mxu0 0.0
    %1405 = vmatprep.subr.mxu0 0.0
    %1406 = vmatpush1.msra.mxu0 0.0
    %1407 = vmatprep.subr.mxu0 0.0
    %1408 = vmatpush1.msra.mxu0 0.0
    %1409 = vmatprep.subr.mxu0 0.0
    %1410 = vmatpush1.msra.mxu0 0.0
    %1411 = vmatprep.subr.mxu0 0.0
    %1412 = vmatpush1.msra.mxu0 0.0
    %1413 = vmatprep.subr.mxu0 0.0
    %1414 = vmatpush1.msra.mxu0 0.0
    %1415 = vmatprep.subr.mxu0 0.0
    %1416 = vmatpush1.msra.mxu0 0.0
    %1417 = vmatprep.subr.mxu0 0.0
    %1418 = vmatpush1.msra.mxu0 0.0
    %1419 = vmatprep.subr.mxu0 0.0
    %1420 = vmatpush1.msra.mxu0 0.0
    %1421 = vmatprep.subr.mxu0 0.0
    %1422 = vmatpush1.msra.mxu0 0.0
    %1423 = vmatprep.subr.mxu0 0.0
    %1424 = vmatpush1.msra.mxu0 0.0
    %1425 = vmatprep.subr.mxu0 0.0
    %1426 = vmatpush1.msra.mxu0 %v1393
    %1427 = vmatprep.subr.mxu0 0.0
    %1428 = vmatpush2.msra.mxu0 0.0
    %1429 = vmatprep.subr.mxu0 0.0
    %1430 = vmatpush2.msra.mxu0 0.0
    %1431 = vmatprep.subr.mxu0 0.0
    %1432 = vmatpush2.msra.mxu0 0.0
    %1433 = vmatprep.subr.mxu0 0.0
    %1434 = vmatpush2.msra.mxu0 0.0
    %1435 = vmatprep.subr.mxu0 0.0
    %1436 = vmatpush2.msra.mxu0 0.0
    %1437 = vmatprep.subr.mxu0 0.0
    %1438 = vmatpush2.msra.mxu0 0.0
    %1439 = vmatprep.subr.mxu0 0.0
    %1440 = vmatpush2.msra.mxu0 0.0
    %1441 = vmatprep.subr.mxu0 0.0
    %1442 = vmatpush2.msra.mxu0 0.0
    %1443 = vmatprep.subr.mxu0 0.0
    %1444 = vmatpush2.msra.mxu0 0.0
    %1445 = vmatprep.subr.mxu0 0.0
    %1446 = vmatpush2.msra.mxu0 0.0
    %1447 = vmatprep.subr.mxu0 0.0
    %1448 = vmatpush2.msra.mxu0 0.0
    %1449 = vmatprep.subr.mxu0 0.0
    %1450 = vmatpush2.msra.mxu0 0.0
    %1451 = vmatprep.subr.mxu0 0.0
    %1452 = vmatpush2.msra.mxu0 0.0
    %1453 = vmatprep.subr.mxu0 0.0
    %1454 = vmatpush2.msra.mxu0 0.0
    %1455 = vmatprep.subr.mxu0 0.0
    %1456 = vmatpush2.msra.mxu0 0.0
    %1457 = vmatprep.subr.mxu0 0.0
    %1458 = vmatpush2.msra.mxu0 0.0
    %1459 = vmatprep.mubr.f32.mxu0 0.0
    %1460 = vmatmul.mubr.f32.gmra.mxu0 %v642
    %v1461 = vpop.f32.mrf.mxu0
    %v1462 = vadd.f32 %v1374, %v1461
    %v1463 = vpop.f32.mrf.mxu0
    %1464 = vmatprep.mubr.f32.mxu0 0.0
    %1465 = vmatmul.mubr.f32.gmra.mxu0 %v645
    %v1466 = vpop.f32.mrf.mxu0
    %v1467 = vadd.f32 %v1379, %v1466
    %v1468 = vpop.f32.mrf.mxu0
    %1469 = vmatprep.mubr.f32.mxu0 0.0
    %1470 = vmatmul.mubr.f32.gmra.mxu0 %v648
    %v1471 = vpop.f32.mrf.mxu0
    %v1472 = vadd.f32 %v1384, %v1471
    %v1473 = vpop.f32.mrf.mxu0
    %1474 = vmatprep.mubr.f32.mxu0 0.0
    %1475 = vmatmul.mubr.f32.gmra.mxu0 %v651
    %v1476 = vpop.f32.mrf.mxu0
    %v1477 = vadd.f32 %v1389, %v1476
    %v1478 = vpop.f32.mrf.mxu0
    %1479 = vdwg.mxu0
    %1480 = vrot.lane.b32.xlu0 %v485, 80
    %v1481 = vpop.permute.xlu0 %1480
    %1483 = vmatprep.subr.mxu0 0.0
    %1484 = vmatpush1.msra.mxu0 0.0
    %1485 = vmatprep.subr.mxu0 0.0
    %1486 = vmatpush1.msra.mxu0 0.0
    %1487 = vmatprep.subr.mxu0 0.0
    %1488 = vmatpush1.msra.mxu0 0.0
    %1489 = vmatprep.subr.mxu0 0.0
    %1490 = vmatpush1.msra.mxu0 0.0
    %1491 = vmatprep.subr.mxu0 0.0
    %1492 = vmatpush1.msra.mxu0 0.0
    %1493 = vmatprep.subr.mxu0 0.0
    %1494 = vmatpush1.msra.mxu0 0.0
    %1495 = vmatprep.subr.mxu0 0.0
    %1496 = vmatpush1.msra.mxu0 0.0
    %1497 = vmatprep.subr.mxu0 0.0
    %1498 = vmatpush1.msra.mxu0 0.0
    %1499 = vmatprep.subr.mxu0 0.0
    %1500 = vmatpush1.msra.mxu0 0.0
    %1501 = vmatprep.subr.mxu0 0.0
    %1502 = vmatpush1.msra.mxu0 0.0
    %1503 = vmatprep.subr.mxu0 0.0
    %1504 = vmatpush1.msra.mxu0 0.0
    %1505 = vmatprep.subr.mxu0 0.0
    %1506 = vmatpush1.msra.mxu0 0.0
    %1507 = vmatprep.subr.mxu0 0.0
    %1508 = vmatpush1.msra.mxu0 0.0
    %1509 = vmatprep.subr.mxu0 0.0
    %1510 = vmatpush1.msra.mxu0 0.0
    %1511 = vmatprep.subr.mxu0 0.0
    %1512 = vmatpush1.msra.mxu0 0.0
    %1513 = vmatprep.subr.mxu0 0.0
    %1514 = vmatpush1.msra.mxu0 %v1481
    %1515 = vmatprep.subr.mxu0 0.0
    %1516 = vmatpush2.msra.mxu0 0.0
    %1517 = vmatprep.subr.mxu0 0.0
    %1518 = vmatpush2.msra.mxu0 0.0
    %1519 = vmatprep.subr.mxu0 0.0
    %1520 = vmatpush2.msra.mxu0 0.0
    %1521 = vmatprep.subr.mxu0 0.0
    %1522 = vmatpush2.msra.mxu0 0.0
    %1523 = vmatprep.subr.mxu0 0.0
    %1524 = vmatpush2.msra.mxu0 0.0
    %1525 = vmatprep.subr.mxu0 0.0
    %1526 = vmatpush2.msra.mxu0 0.0
    %1527 = vmatprep.subr.mxu0 0.0
    %1528 = vmatpush2.msra.mxu0 0.0
    %1529 = vmatprep.subr.mxu0 0.0
    %1530 = vmatpush2.msra.mxu0 0.0
    %1531 = vmatprep.subr.mxu0 0.0
    %1532 = vmatpush2.msra.mxu0 0.0
    %1533 = vmatprep.subr.mxu0 0.0
    %1534 = vmatpush2.msra.mxu0 0.0
    %1535 = vmatprep.subr.mxu0 0.0
    %1536 = vmatpush2.msra.mxu0 0.0
    %1537 = vmatprep.subr.mxu0 0.0
    %1538 = vmatpush2.msra.mxu0 0.0
    %1539 = vmatprep.subr.mxu0 0.0
    %1540 = vmatpush2.msra.mxu0 0.0
    %1541 = vmatprep.subr.mxu0 0.0
    %1542 = vmatpush2.msra.mxu0 0.0
    %1543 = vmatprep.subr.mxu0 0.0
    %1544 = vmatpush2.msra.mxu0 0.0
    %1545 = vmatprep.subr.mxu0 0.0
    %1546 = vmatpush2.msra.mxu0 0.0
    %1547 = vmatprep.mubr.f32.mxu0 0.0
    %1548 = vmatmul.mubr.f32.gmra.mxu0 %v742
    %v1549 = vpop.f32.mrf.mxu0
    %v1550 = vadd.f32 0.0, %v1549
    %v1551 = vpop.f32.mrf.mxu0
    %1552 = vmatprep.mubr.f32.mxu0 0.0
    %1553 = vmatmul.mubr.f32.gmra.mxu0 %v745
    %v1554 = vpop.f32.mrf.mxu0
    %v1555 = vadd.f32 0.0, %v1554
    %v1556 = vpop.f32.mrf.mxu0
    %1557 = vmatprep.mubr.f32.mxu0 0.0
    %1558 = vmatmul.mubr.f32.gmra.mxu0 %v748
    %v1559 = vpop.f32.mrf.mxu0
    %v1560 = vadd.f32 0.0, %v1559
    %v1561 = vpop.f32.mrf.mxu0
    %1562 = vmatprep.mubr.f32.mxu0 0.0
    %1563 = vmatmul.mubr.f32.gmra.mxu0 %v751
    %v1564 = vpop.f32.mrf.mxu0
    %v1565 = vadd.f32 0.0, %v1564
    %v1566 = vpop.f32.mrf.mxu0
    %1567 = vdwg.mxu0
    %v1568 = vadd.f32 %v1462, %v1550
    %v1569 = vadd.f32 %v1467, %v1555
    %v1570 = vadd.f32 %v1472, %v1560
    %v1571 = vadd.f32 %v1477, %v1565
    %1572 = vrot.lane.b32.xlu0 %v485, 72
    %v1573 = vpop.permute.xlu0 %1572
    %1575 = vmatprep.subr.mxu0 0.0
    %1576 = vmatpush1.msra.mxu0 0.0
    %1577 = vmatprep.subr.mxu0 0.0
    %1578 = vmatpush1.msra.mxu0 0.0
    %1579 = vmatprep.subr.mxu0 0.0
    %1580 = vmatpush1.msra.mxu0 0.0
    %1581 = vmatprep.subr.mxu0 0.0
    %1582 = vmatpush1.msra.mxu0 0.0
    %1583 = vmatprep.subr.mxu0 0.0
    %1584 = vmatpush1.msra.mxu0 0.0
    %1585 = vmatprep.subr.mxu0 0.0
    %1586 = vmatpush1.msra.mxu0 0.0
    %1587 = vmatprep.subr.mxu0 0.0
    %1588 = vmatpush1.msra.mxu0 0.0
    %1589 = vmatprep.subr.mxu0 0.0
    %1590 = vmatpush1.msra.mxu0 0.0
    %1591 = vmatprep.subr.mxu0 0.0
    %1592 = vmatpush1.msra.mxu0 0.0
    %1593 = vmatprep.subr.mxu0 0.0
    %1594 = vmatpush1.msra.mxu0 0.0
    %1595 = vmatprep.subr.mxu0 0.0
    %1596 = vmatpush1.msra.mxu0 0.0
    %1597 = vmatprep.subr.mxu0 0.0
    %1598 = vmatpush1.msra.mxu0 0.0
    %1599 = vmatprep.subr.mxu0 0.0
    %1600 = vmatpush1.msra.mxu0 0.0
    %1601 = vmatprep.subr.mxu0 0.0
    %1602 = vmatpush1.msra.mxu0 0.0
    %1603 = vmatprep.subr.mxu0 0.0
    %1604 = vmatpush1.msra.mxu0 0.0
    %1605 = vmatprep.subr.mxu0 0.0
    %1606 = vmatpush1.msra.mxu0 %v1573
    %1607 = vmatprep.subr.mxu0 0.0
    %1608 = vmatpush2.msra.mxu0 0.0
    %1609 = vmatprep.subr.mxu0 0.0
    %1610 = vmatpush2.msra.mxu0 0.0
    %1611 = vmatprep.subr.mxu0 0.0
    %1612 = vmatpush2.msra.mxu0 0.0
    %1613 = vmatprep.subr.mxu0 0.0
    %1614 = vmatpush2.msra.mxu0 0.0
    %1615 = vmatprep.subr.mxu0 0.0
    %1616 = vmatpush2.msra.mxu0 0.0
    %1617 = vmatprep.subr.mxu0 0.0
    %1618 = vmatpush2.msra.mxu0 0.0
    %1619 = vmatprep.subr.mxu0 0.0
    %1620 = vmatpush2.msra.mxu0 0.0
    %1621 = vmatprep.subr.mxu0 0.0
    %1622 = vmatpush2.msra.mxu0 0.0
    %1623 = vmatprep.subr.mxu0 0.0
    %1624 = vmatpush2.msra.mxu0 0.0
    %1625 = vmatprep.subr.mxu0 0.0
    %1626 = vmatpush2.msra.mxu0 0.0
    %1627 = vmatprep.subr.mxu0 0.0
    %1628 = vmatpush2.msra.mxu0 0.0
    %1629 = vmatprep.subr.mxu0 0.0
    %1630 = vmatpush2.msra.mxu0 0.0
    %1631 = vmatprep.subr.mxu0 0.0
    %1632 = vmatpush2.msra.mxu0 0.0
    %1633 = vmatprep.subr.mxu0 0.0
    %1634 = vmatpush2.msra.mxu0 0.0
    %1635 = vmatprep.subr.mxu0 0.0
    %1636 = vmatpush2.msra.mxu0 0.0
    %1637 = vmatprep.subr.mxu0 0.0
    %1638 = vmatpush2.msra.mxu0 0.0
    %1639 = vmatprep.mubr.f32.mxu0 0.0
    %1640 = vmatmul.mubr.f32.gmra.mxu0 %v846
    %v1641 = vpop.f32.mrf.mxu0
    %v1642 = vadd.f32 0.0, %v1641
    %v1643 = vpop.f32.mrf.mxu0
    %1644 = vmatprep.mubr.f32.mxu0 0.0
    %1645 = vmatmul.mubr.f32.gmra.mxu0 %v849
    %v1646 = vpop.f32.mrf.mxu0
    %v1647 = vadd.f32 0.0, %v1646
    %v1648 = vpop.f32.mrf.mxu0
    %1649 = vmatprep.mubr.f32.mxu0 0.0
    %1650 = vmatmul.mubr.f32.gmra.mxu0 %v852
    %v1651 = vpop.f32.mrf.mxu0
    %v1652 = vadd.f32 0.0, %v1651
    %v1653 = vpop.f32.mrf.mxu0
    %1654 = vmatprep.mubr.f32.mxu0 0.0
    %1655 = vmatmul.mubr.f32.gmra.mxu0 %v855
    %v1656 = vpop.f32.mrf.mxu0
    %v1657 = vadd.f32 0.0, %v1656
    %v1658 = vpop.f32.mrf.mxu0
    %1659 = vdwg.mxu0
    %v1660 = vadd.f32 %v1568, %v1642
    %v1661 = vadd.f32 %v1569, %v1647
    %v1662 = vadd.f32 %v1570, %v1652
    %v1663 = vadd.f32 %v1571, %v1657
    %v1664 = vand.u32 %v143, 7
    %v1665 = vand.u32 %v144, 7
    %v1666 = vand.u32 %v486, 7
    %v1667 = vand.u32 %v487, 7
    %v1668 = vshra.s32 %v1664, 1
    %v1669 = vshra.s32 %v1665, 1
    %v1670 = vshra.s32 %v1666, 1
    %v1671 = vshra.s32 %v1667, 1
    %v1672 = vand.u32 %v127, 7
    %v1673 = vshra.s32 %v1672, 1
    %vm1674 = vcmp.eq.s32.totalorder %v1668, %v1673
    %vm1675 = vcmp.eq.s32.totalorder %v1669, %v1673
    %vm1676 = vcmp.eq.s32.totalorder %v1670, %v1673
    %vm1677 = vcmp.eq.s32.totalorder %v1671, %v1673
    %v1679 = vsel %vm543, %v942, 0
    %v1682 = vsel %vm543, %v943, 0
    %v1685 = vsel %vm543, %v944, 0
    %v1688 = vsel %vm543, %v945, 0
    %v1691 = vsel %vm543, %v1300, 0
    %v1694 = vsel %vm543, %v1301, 0
    %v1697 = vsel %vm543, %v1302, 0
    %v1700 = vsel %vm543, %v1303, 0
    %1702 = vmatprep.subr.mxu0 0.0
    %1703 = vmatpush1.xpose.msra.mxu0 0.0
    %1704 = vmatprep.subr.mxu0 0.0
    %1705 = vmatpush1.xpose.msra.mxu0 0.0
    %1706 = vmatprep.subr.mxu0 0.0
    %1707 = vmatpush1.xpose.msra.mxu0 0.0
    %1708 = vmatprep.subr.mxu0 0.0
    %1709 = vmatpush1.xpose.msra.mxu0 0.0
    %1710 = vmatprep.subr.mxu0 0.0
    %1711 = vmatpush1.xpose.msra.mxu0 0.0
    %1712 = vmatprep.subr.mxu0 0.0
    %1713 = vmatpush1.xpose.msra.mxu0 0.0
    %1714 = vmatprep.subr.mxu0 0.0
    %1715 = vmatpush1.xpose.msra.mxu0 0.0
    %1716 = vmatprep.subr.mxu0 0.0
    %1717 = vmatpush1.xpose.msra.mxu0 0.0
    %1718 = vmatprep.subr.mxu0 0.0
    %1719 = vmatpush1.xpose.msra.mxu0 0.0
    %1720 = vmatprep.subr.mxu0 0.0
    %1721 = vmatpush1.xpose.msra.mxu0 0.0
    %1722 = vmatprep.subr.mxu0 0.0
    %1723 = vmatpush1.xpose.msra.mxu0 0.0
    %1724 = vmatprep.subr.mxu0 0.0
    %1725 = vmatpush1.xpose.msra.mxu0 0.0
    %1726 = vmatprep.subr.mxu0 0.0
    %1727 = vmatpush1.xpose.msra.mxu0 %v1700
    %1728 = vmatprep.subr.mxu0 0.0
    %1729 = vmatpush1.xpose.msra.mxu0 %v1697
    %1730 = vmatprep.subr.mxu0 0.0
    %1731 = vmatpush1.xpose.msra.mxu0 %v1694
    %1732 = vmatprep.subr.mxu0 0.0
    %1733 = vmatpush1.xpose.msra.mxu0 %v1691
    %1734 = vmatprep.subr.mxu0 0.0
    %1735 = vmatpush2.xpose.msra.mxu0 0.0
    %1736 = vmatprep.subr.mxu0 0.0
    %1737 = vmatpush2.xpose.msra.mxu0 0.0
    %1738 = vmatprep.subr.mxu0 0.0
    %1739 = vmatpush2.xpose.msra.mxu0 0.0
    %1740 = vmatprep.subr.mxu0 0.0
    %1741 = vmatpush2.xpose.msra.mxu0 0.0
    %1742 = vmatprep.subr.mxu0 0.0
    %1743 = vmatpush2.xpose.msra.mxu0 0.0
    %1744 = vmatprep.subr.mxu0 0.0
    %1745 = vmatpush2.xpose.msra.mxu0 0.0
    %1746 = vmatprep.subr.mxu0 0.0
    %1747 = vmatpush2.xpose.msra.mxu0 0.0
    %1748 = vmatprep.subr.mxu0 0.0
    %1749 = vmatpush2.xpose.msra.mxu0 0.0
    %1750 = vmatprep.subr.mxu0 0.0
    %1751 = vmatpush2.xpose.msra.mxu0 0.0
    %1752 = vmatprep.subr.mxu0 0.0
    %1753 = vmatpush2.xpose.msra.mxu0 0.0
    %1754 = vmatprep.subr.mxu0 0.0
    %1755 = vmatpush2.xpose.msra.mxu0 0.0
    %1756 = vmatprep.subr.mxu0 0.0
    %1757 = vmatpush2.xpose.msra.mxu0 0.0
    %1758 = vmatprep.subr.mxu0 0.0
    %1759 = vmatpush2.xpose.msra.mxu0 0.0
    %1760 = vmatprep.subr.mxu0 0.0
    %1761 = vmatpush2.xpose.msra.mxu0 0.0
    %1762 = vmatprep.subr.mxu0 0.0
    %1763 = vmatpush2.xpose.msra.mxu0 0.0
    %1764 = vmatprep.subr.mxu0 0.0
    %1765 = vmatpush2.xpose.msra.mxu0 0.0
    %1766 = vmatprep.mubr.f32.mxu0 0.0
    %1767 = vmatmul.mubr.f32.gmra.mxu0 %v1679
    %v1768 = vpop.f32.mrf.mxu0
    %v1769 = vadd.f32 0.0, %v1768
    %v1770 = vpop.f32.mrf.mxu0
    %1771 = vmatprep.mubr.f32.mxu0 0.0
    %1772 = vmatmul.mubr.f32.gmra.mxu0 %v1682
    %v1773 = vpop.f32.mrf.mxu0
    %v1774 = vadd.f32 0.0, %v1773
    %v1775 = vpop.f32.mrf.mxu0
    %1776 = vmatprep.mubr.f32.mxu0 0.0
    %1777 = vmatmul.mubr.f32.gmra.mxu0 %v1685
    %v1778 = vpop.f32.mrf.mxu0
    %v1779 = vadd.f32 0.0, %v1778
    %v1780 = vpop.f32.mrf.mxu0
    %1781 = vmatprep.mubr.f32.mxu0 0.0
    %1782 = vmatmul.mubr.f32.gmra.mxu0 %v1688
    %v1783 = vpop.f32.mrf.mxu0
    %v1784 = vadd.f32 0.0, %v1783
    %v1785 = vpop.f32.mrf.mxu0
    %1786 = vdwg.mxu0
    %v1787 = vmul.f32 %v1769, 0.35355338
    %v1788 = vmul.f32 %v1774, 0.35355338
    %v1789 = vmul.f32 %v1779, 0.35355338
    %v1790 = vmul.f32 %v1784, 0.35355338
    %v1791 = vsel %vm1674, %v1787, -1e+30
    %v1792 = vsel %vm1675, %v1788, -1e+30
    %v1793 = vsel %vm1676, %v1789, -1e+30
    %v1794 = vsel %vm1677, %v1790, -1e+30
    %v1795 = vsel %vm160, %v1791, -inf
    %1796 = vmax.xlane.f32.xlu0 %v1795
    %v1797 = vpop.xlane.xlu0 %1796
    %v1798 = vsel %vm160, %v1792, -inf
    %1799 = vmax.xlane.f32.xlu0 %v1798
    %v1800 = vpop.xlane.xlu0 %1799
    %v1801 = vsel %vm160, %v1793, -inf
    %1802 = vmax.xlane.f32.xlu0 %v1801
    %v1803 = vpop.xlane.xlu0 %1802
    %v1804 = vsel %vm160, %v1794, -inf
    %1805 = vmax.xlane.f32.xlu0 %v1804
    %v1806 = vpop.xlane.xlu0 %1805
    %v1807 = vsub.f32 %v1791, %v1797
    %v1808 = vsub.f32 %v1792, %v1800
    %v1809 = vsub.f32 %v1793, %v1803
    %v1810 = vsub.f32 %v1794, %v1806
    %v1811 = vmul.f32 %v1807, 1.442695
    %v1812 = vpow.pop %v1811
    %v1813 = vmul.f32 %v1808, 1.442695
    %v1814 = vpow.pop %v1813
    %v1815 = vmul.f32 %v1809, 1.442695
    %v1816 = vpow.pop %v1815
    %v1817 = vmul.f32 %v1810, 1.442695
    %v1818 = vpow.pop %v1817
    %v1819 = vsel %vm1674, %v1812, 0.0
    %v1820 = vsel %vm1675, %v1814, 0.0
    %v1821 = vsel %vm1676, %v1816, 0.0
    %v1822 = vsel %vm1677, %v1818, 0.0
    %v1823 = vsel %vm160, %v1819, 0.0
    %1824 = vadd.xlane.f32.xlu0 %v1823
    %v1825 = vpop.xlane.xlu0 %1824
    %v1826 = vsel %vm160, %v1820, 0.0
    %1827 = vadd.xlane.f32.xlu0 %v1826
    %v1828 = vpop.xlane.xlu0 %1827
    %v1829 = vsel %vm160, %v1821, 0.0
    %1830 = vadd.xlane.f32.xlu0 %v1829
    %v1831 = vpop.xlane.xlu0 %1830
    %v1832 = vsel %vm160, %v1822, 0.0
    %1833 = vadd.xlane.f32.xlu0 %v1832
    %v1834 = vpop.xlane.xlu0 %1833
    %v1835 = vrcp.pop %v1825
    %v1836 = vrcp.pop %v1828
    %v1837 = vrcp.pop %v1831
    %v1838 = vrcp.pop %v1834
    %v1839 = vmul.f32 %v1819, %v1835
    %v1840 = vmul.f32 %v1820, %v1836
    %v1841 = vmul.f32 %v1821, %v1837
    %v1842 = vmul.f32 %v1822, %v1838
    %v1844 = vsel %vm160, %v1839, 0
    %v1847 = vsel %vm160, %v1840, 0
    %v1850 = vsel %vm160, %v1841, 0
    %v1853 = vsel %vm160, %v1842, 0
    %1855 = vmatprep.subr.mxu0 0.0
    %1856 = vmatpush1.msra.mxu0 0.0
    %1857 = vmatprep.subr.mxu0 0.0
    %1858 = vmatpush1.msra.mxu0 0.0
    %1859 = vmatprep.subr.mxu0 0.0
    %1860 = vmatpush1.msra.mxu0 0.0
    %1861 = vmatprep.subr.mxu0 0.0
    %1862 = vmatpush1.msra.mxu0 0.0
    %1863 = vmatprep.subr.mxu0 0.0
    %1864 = vmatpush1.msra.mxu0 0.0
    %1865 = vmatprep.subr.mxu0 0.0
    %1866 = vmatpush1.msra.mxu0 0.0
    %1867 = vmatprep.subr.mxu0 0.0
    %1868 = vmatpush1.msra.mxu0 0.0
    %1869 = vmatprep.subr.mxu0 0.0
    %1870 = vmatpush1.msra.mxu0 0.0
    %1871 = vmatprep.subr.mxu0 0.0
    %1872 = vmatpush1.msra.mxu0 0.0
    %1873 = vmatprep.subr.mxu0 0.0
    %1874 = vmatpush1.msra.mxu0 0.0
    %1875 = vmatprep.subr.mxu0 0.0
    %1876 = vmatpush1.msra.mxu0 0.0
    %1877 = vmatprep.subr.mxu0 0.0
    %1878 = vmatpush1.msra.mxu0 0.0
    %1879 = vmatprep.subr.mxu0 0.0
    %1880 = vmatpush1.msra.mxu0 %v1663
    %1881 = vmatprep.subr.mxu0 0.0
    %1882 = vmatpush1.msra.mxu0 %v1662
    %1883 = vmatprep.subr.mxu0 0.0
    %1884 = vmatpush1.msra.mxu0 %v1661
    %1885 = vmatprep.subr.mxu0 0.0
    %1886 = vmatpush1.msra.mxu0 %v1660
    %1887 = vmatprep.subr.mxu0 0.0
    %1888 = vmatpush2.msra.mxu0 0.0
    %1889 = vmatprep.subr.mxu0 0.0
    %1890 = vmatpush2.msra.mxu0 0.0
    %1891 = vmatprep.subr.mxu0 0.0
    %1892 = vmatpush2.msra.mxu0 0.0
    %1893 = vmatprep.subr.mxu0 0.0
    %1894 = vmatpush2.msra.mxu0 0.0
    %1895 = vmatprep.subr.mxu0 0.0
    %1896 = vmatpush2.msra.mxu0 0.0
    %1897 = vmatprep.subr.mxu0 0.0
    %1898 = vmatpush2.msra.mxu0 0.0
    %1899 = vmatprep.subr.mxu0 0.0
    %1900 = vmatpush2.msra.mxu0 0.0
    %1901 = vmatprep.subr.mxu0 0.0
    %1902 = vmatpush2.msra.mxu0 0.0
    %1903 = vmatprep.subr.mxu0 0.0
    %1904 = vmatpush2.msra.mxu0 0.0
    %1905 = vmatprep.subr.mxu0 0.0
    %1906 = vmatpush2.msra.mxu0 0.0
    %1907 = vmatprep.subr.mxu0 0.0
    %1908 = vmatpush2.msra.mxu0 0.0
    %1909 = vmatprep.subr.mxu0 0.0
    %1910 = vmatpush2.msra.mxu0 0.0
    %1911 = vmatprep.subr.mxu0 0.0
    %1912 = vmatpush2.msra.mxu0 0.0
    %1913 = vmatprep.subr.mxu0 0.0
    %1914 = vmatpush2.msra.mxu0 0.0
    %1915 = vmatprep.subr.mxu0 0.0
    %1916 = vmatpush2.msra.mxu0 0.0
    %1917 = vmatprep.subr.mxu0 0.0
    %1918 = vmatpush2.msra.mxu0 0.0
    %1919 = vmatprep.mubr.f32.mxu0 0.0
    %1920 = vmatmul.mubr.f32.gmra.mxu0 %v1844
    %v1921 = vpop.f32.mrf.mxu0
    %v1922 = vadd.f32 0.0, %v1921
    %v1923 = vpop.f32.mrf.mxu0
    %1924 = vmatprep.mubr.f32.mxu0 0.0
    %1925 = vmatmul.mubr.f32.gmra.mxu0 %v1847
    %v1926 = vpop.f32.mrf.mxu0
    %v1927 = vadd.f32 0.0, %v1926
    %v1928 = vpop.f32.mrf.mxu0
    %1929 = vmatprep.mubr.f32.mxu0 0.0
    %1930 = vmatmul.mubr.f32.gmra.mxu0 %v1850
    %v1931 = vpop.f32.mrf.mxu0
    %v1932 = vadd.f32 0.0, %v1931
    %v1933 = vpop.f32.mrf.mxu0
    %1934 = vmatprep.mubr.f32.mxu0 0.0
    %1935 = vmatmul.mubr.f32.gmra.mxu0 %v1853
    %v1936 = vpop.f32.mrf.mxu0
    %v1937 = vadd.f32 0.0, %v1936
    %v1938 = vpop.f32.mrf.mxu0
    %1939 = vdwg.mxu0
    %v1940 = vld [vmem:[#allocation10] sm:$0xff]
    %v1941 = vld [vmem:[#allocation7] sm:$0xff]
    %v1942 = vld [vmem:[#allocation10 + $0x8] sm:$0xff]
    %v1944 = vsel %vm543, %v1927, 0
    %1946 = vmatprep.subr.mxu0 0.0
    %1947 = vmatpush1.msra.mxu0 0.0
    %1948 = vmatprep.subr.mxu0 0.0
    %1949 = vmatpush1.msra.mxu0 0.0
    %1950 = vmatprep.subr.mxu0 0.0
    %1951 = vmatpush1.msra.mxu0 0.0
    %1952 = vmatprep.subr.mxu0 0.0
    %1953 = vmatpush1.msra.mxu0 0.0
    %1954 = vmatprep.subr.mxu0 0.0
    %1955 = vmatpush1.msra.mxu0 0.0
    %1956 = vmatprep.subr.mxu0 0.0
    %1957 = vmatpush1.msra.mxu0 0.0
    %1958 = vmatprep.subr.mxu0 0.0
    %1959 = vmatpush1.msra.mxu0 0.0
    %1960 = vmatprep.subr.mxu0 0.0
    %1961 = vmatpush1.msra.mxu0 0.0
    %1962 = vmatprep.subr.mxu0 0.0
    %1963 = vmatpush1.msra.mxu0 0.0
    %1964 = vmatprep.subr.mxu0 0.0
    %1965 = vmatpush1.msra.mxu0 0.0
    %1966 = vmatprep.subr.mxu0 0.0
    %1967 = vmatpush1.msra.mxu0 0.0
    %1968 = vmatprep.subr.mxu0 0.0
    %1969 = vmatpush1.msra.mxu0 0.0
    %1970 = vmatprep.subr.mxu0 0.0
    %1971 = vmatpush1.msra.mxu0 0.0
    %1972 = vmatprep.subr.mxu0 0.0
    %1973 = vmatpush1.msra.mxu0 0.0
    %1974 = vmatprep.subr.mxu0 0.0
    %1975 = vmatpush1.msra.mxu0 0.0
    %1976 = vmatprep.subr.mxu0 0.0
    %1977 = vmatpush1.msra.mxu0 %v1942
    %1978 = vmatprep.subr.mxu0 0.0
    %1979 = vmatpush2.msra.mxu0 0.0
    %1980 = vmatprep.subr.mxu0 0.0
    %1981 = vmatpush2.msra.mxu0 0.0
    %1982 = vmatprep.subr.mxu0 0.0
    %1983 = vmatpush2.msra.mxu0 0.0
    %1984 = vmatprep.subr.mxu0 0.0
    %1985 = vmatpush2.msra.mxu0 0.0
    %1986 = vmatprep.subr.mxu0 0.0
    %1987 = vmatpush2.msra.mxu0 0.0
    %1988 = vmatprep.subr.mxu0 0.0
    %1989 = vmatpush2.msra.mxu0 0.0
    %1990 = vmatprep.subr.mxu0 0.0
    %1991 = vmatpush2.msra.mxu0 0.0
    %1992 = vmatprep.subr.mxu0 0.0
    %1993 = vmatpush2.msra.mxu0 0.0
    %1994 = vmatprep.subr.mxu0 0.0
    %1995 = vmatpush2.msra.mxu0 0.0
    %1996 = vmatprep.subr.mxu0 0.0
    %1997 = vmatpush2.msra.mxu0 0.0
    %1998 = vmatprep.subr.mxu0 0.0
    %1999 = vmatpush2.msra.mxu0 0.0
    %2000 = vmatprep.subr.mxu0 0.0
    %2001 = vmatpush2.msra.mxu0 0.0
    %2002 = vmatprep.subr.mxu0 0.0
    %2003 = vmatpush2.msra.mxu0 0.0
    %2004 = vmatprep.subr.mxu0 0.0
    %2005 = vmatpush2.msra.mxu0 0.0
    %2006 = vmatprep.subr.mxu0 0.0
    %2007 = vmatpush2.msra.mxu0 0.0
    %2008 = vmatprep.subr.mxu0 0.0
    %2009 = vmatpush2.msra.mxu0 0.0
    %2010 = vmatprep.mubr.f32.mxu0 0.0
    %2011 = vmatmul.mubr.f32.gmra.mxu0 %v1944
    %v2012 = vpop.f32.mrf.mxu0
    %v2013 = vadd.f32 0.0, %v2012
    %v2014 = vpop.f32.mrf.mxu0
    %2015 = vdwg.mxu0
    %v2017 = vsel %vm543, %v1922, 0
    %2019 = vmatprep.subr.mxu0 0.0
    %2020 = vmatpush1.msra.mxu0 0.0
    %2021 = vmatprep.subr.mxu0 0.0
    %2022 = vmatpush1.msra.mxu0 0.0
    %2023 = vmatprep.subr.mxu0 0.0
    %2024 = vmatpush1.msra.mxu0 0.0
    %2025 = vmatprep.subr.mxu0 0.0
    %2026 = vmatpush1.msra.mxu0 0.0
    %2027 = vmatprep.subr.mxu0 0.0
    %2028 = vmatpush1.msra.mxu0 0.0
    %2029 = vmatprep.subr.mxu0 0.0
    %2030 = vmatpush1.msra.mxu0 0.0
    %2031 = vmatprep.subr.mxu0 0.0
    %2032 = vmatpush1.msra.mxu0 0.0
    %2033 = vmatprep.subr.mxu0 0.0
    %2034 = vmatpush1.msra.mxu0 0.0
    %2035 = vmatprep.subr.mxu0 0.0
    %2036 = vmatpush1.msra.mxu0 0.0
    %2037 = vmatprep.subr.mxu0 0.0
    %2038 = vmatpush1.msra.mxu0 0.0
    %2039 = vmatprep.subr.mxu0 0.0
    %2040 = vmatpush1.msra.mxu0 0.0
    %2041 = vmatprep.subr.mxu0 0.0
    %2042 = vmatpush1.msra.mxu0 0.0
    %2043 = vmatprep.subr.mxu0 0.0
    %2044 = vmatpush1.msra.mxu0 0.0
    %2045 = vmatprep.subr.mxu0 0.0
    %2046 = vmatpush1.msra.mxu0 0.0
    %2047 = vmatprep.subr.mxu0 0.0
    %2048 = vmatpush1.msra.mxu0 0.0
    %2049 = vmatprep.subr.mxu0 0.0
    %2050 = vmatpush1.msra.mxu0 %v1940
    %2051 = vmatprep.subr.mxu0 0.0
    %2052 = vmatpush2.msra.mxu0 0.0
    %2053 = vmatprep.subr.mxu0 0.0
    %2054 = vmatpush2.msra.mxu0 0.0
    %2055 = vmatprep.subr.mxu0 0.0
    %2056 = vmatpush2.msra.mxu0 0.0
    %2057 = vmatprep.subr.mxu0 0.0
    %2058 = vmatpush2.msra.mxu0 0.0
    %2059 = vmatprep.subr.mxu0 0.0
    %2060 = vmatpush2.msra.mxu0 0.0
    %2061 = vmatprep.subr.mxu0 0.0
    %2062 = vmatpush2.msra.mxu0 0.0
    %2063 = vmatprep.subr.mxu0 0.0
    %2064 = vmatpush2.msra.mxu0 0.0
    %2065 = vmatprep.subr.mxu0 0.0
    %2066 = vmatpush2.msra.mxu0 0.0
    %2067 = vmatprep.subr.mxu0 0.0
    %2068 = vmatpush2.msra.mxu0 0.0
    %2069 = vmatprep.subr.mxu0 0.0
    %2070 = vmatpush2.msra.mxu0 0.0
    %2071 = vmatprep.subr.mxu0 0.0
    %2072 = vmatpush2.msra.mxu0 0.0
    %2073 = vmatprep.subr.mxu0 0.0
    %2074 = vmatpush2.msra.mxu0 0.0
    %2075 = vmatprep.subr.mxu0 0.0
    %2076 = vmatpush2.msra.mxu0 0.0
    %2077 = vmatprep.subr.mxu0 0.0
    %2078 = vmatpush2.msra.mxu0 0.0
    %2079 = vmatprep.subr.mxu0 0.0
    %2080 = vmatpush2.msra.mxu0 0.0
    %2081 = vmatprep.subr.mxu0 0.0
    %2082 = vmatpush2.msra.mxu0 0.0
    %2083 = vmatprep.mubr.f32.mxu0 0.0
    %2084 = vmatmul.mubr.f32.gmra.mxu0 %v2017
    %v2085 = vpop.f32.mrf.mxu0
    %v2086 = vadd.f32 %v2013, %v2085
    %v2087 = vpop.f32.mrf.mxu0
    %2088 = vdwg.mxu0
    %v2089 = vld [vmem:[#allocation7 + $0x8] sm:$0xff]
    %2090 = vmatprep.subr.mxu0 0.0
    %2091 = vmatpush1.msra.mxu0 0.0
    %2092 = vmatprep.subr.mxu0 0.0
    %2093 = vmatpush1.msra.mxu0 0.0
    %2094 = vmatprep.subr.mxu0 0.0
    %2095 = vmatpush1.msra.mxu0 0.0
    %2096 = vmatprep.subr.mxu0 0.0
    %2097 = vmatpush1.msra.mxu0 0.0
    %2098 = vmatprep.subr.mxu0 0.0
    %2099 = vmatpush1.msra.mxu0 0.0
    %2100 = vmatprep.subr.mxu0 0.0
    %2101 = vmatpush1.msra.mxu0 0.0
    %2102 = vmatprep.subr.mxu0 0.0
    %2103 = vmatpush1.msra.mxu0 0.0
    %2104 = vmatprep.subr.mxu0 0.0
    %2105 = vmatpush1.msra.mxu0 0.0
    %2106 = vmatprep.subr.mxu0 0.0
    %2107 = vmatpush1.msra.mxu0 0.0
    %2108 = vmatprep.subr.mxu0 0.0
    %2109 = vmatpush1.msra.mxu0 0.0
    %2110 = vmatprep.subr.mxu0 0.0
    %2111 = vmatpush1.msra.mxu0 0.0
    %2112 = vmatprep.subr.mxu0 0.0
    %2113 = vmatpush1.msra.mxu0 0.0
    %2114 = vmatprep.subr.mxu0 0.0
    %2115 = vmatpush1.msra.mxu0 0.0
    %2116 = vmatprep.subr.mxu0 0.0
    %2117 = vmatpush1.msra.mxu0 0.0
    %2118 = vmatprep.subr.mxu0 0.0
    %2119 = vmatpush1.msra.mxu0 0.0
    %2120 = vmatprep.subr.mxu0 0.0
    %2121 = vmatpush1.msra.mxu0 %v2089
    %2122 = vmatprep.subr.mxu0 0.0
    %2123 = vmatpush2.msra.mxu0 0.0
    %2124 = vmatprep.subr.mxu0 0.0
    %2125 = vmatpush2.msra.mxu0 0.0
    %2126 = vmatprep.subr.mxu0 0.0
    %2127 = vmatpush2.msra.mxu0 0.0
    %2128 = vmatprep.subr.mxu0 0.0
    %2129 = vmatpush2.msra.mxu0 0.0
    %2130 = vmatprep.subr.mxu0 0.0
    %2131 = vmatpush2.msra.mxu0 0.0
    %2132 = vmatprep.subr.mxu0 0.0
    %2133 = vmatpush2.msra.mxu0 0.0
    %2134 = vmatprep.subr.mxu0 0.0
    %2135 = vmatpush2.msra.mxu0 0.0
    %2136 = vmatprep.subr.mxu0 0.0
    %2137 = vmatpush2.msra.mxu0 0.0
    %2138 = vmatprep.subr.mxu0 0.0
    %2139 = vmatpush2.msra.mxu0 0.0
    %2140 = vmatprep.subr.mxu0 0.0
    %2141 = vmatpush2.msra.mxu0 0.0
    %2142 = vmatprep.subr.mxu0 0.0
    %2143 = vmatpush2.msra.mxu0 0.0
    %2144 = vmatprep.subr.mxu0 0.0
    %2145 = vmatpush2.msra.mxu0 0.0
    %2146 = vmatprep.subr.mxu0 0.0
    %2147 = vmatpush2.msra.mxu0 0.0
    %2148 = vmatprep.subr.mxu0 0.0
    %2149 = vmatpush2.msra.mxu0 0.0
    %2150 = vmatprep.subr.mxu0 0.0
    %2151 = vmatpush2.msra.mxu0 0.0
    %2152 = vmatprep.subr.mxu0 0.0
    %2153 = vmatpush2.msra.mxu0 0.0
    %2154 = vmatprep.mubr.f32.mxu0 0.0
    %2155 = vmatmul.mubr.f32.gmra.mxu0 %v1944
    %v2156 = vpop.f32.mrf.mxu0
    %v2157 = vadd.f32 0.0, %v2156
    %v2158 = vpop.f32.mrf.mxu0
    %2159 = vdwg.mxu0
    %2160 = vmatprep.subr.mxu0 0.0
    %2161 = vmatpush1.msra.mxu0 0.0
    %2162 = vmatprep.subr.mxu0 0.0
    %2163 = vmatpush1.msra.mxu0 0.0
    %2164 = vmatprep.subr.mxu0 0.0
    %2165 = vmatpush1.msra.mxu0 0.0
    %2166 = vmatprep.subr.mxu0 0.0
    %2167 = vmatpush1.msra.mxu0 0.0
    %2168 = vmatprep.subr.mxu0 0.0
    %2169 = vmatpush1.msra.mxu0 0.0
    %2170 = vmatprep.subr.mxu0 0.0
    %2171 = vmatpush1.msra.mxu0 0.0
    %2172 = vmatprep.subr.mxu0 0.0
    %2173 = vmatpush1.msra.mxu0 0.0
    %2174 = vmatprep.subr.mxu0 0.0
    %2175 = vmatpush1.msra.mxu0 0.0
    %2176 = vmatprep.subr.mxu0 0.0
    %2177 = vmatpush1.msra.mxu0 0.0
    %2178 = vmatprep.subr.mxu0 0.0
    %2179 = vmatpush1.msra.mxu0 0.0
    %2180 = vmatprep.subr.mxu0 0.0
    %2181 = vmatpush1.msra.mxu0 0.0
    %2182 = vmatprep.subr.mxu0 0.0
    %2183 = vmatpush1.msra.mxu0 0.0
    %2184 = vmatprep.subr.mxu0 0.0
    %2185 = vmatpush1.msra.mxu0 0.0
    %2186 = vmatprep.subr.mxu0 0.0
    %2187 = vmatpush1.msra.mxu0 0.0
    %2188 = vmatprep.subr.mxu0 0.0
    %2189 = vmatpush1.msra.mxu0 0.0
    %2190 = vmatprep.subr.mxu0 0.0
    %2191 = vmatpush1.msra.mxu0 %v1941
    %2192 = vmatprep.subr.mxu0 0.0
    %2193 = vmatpush2.msra.mxu0 0.0
    %2194 = vmatprep.subr.mxu0 0.0
    %2195 = vmatpush2.msra.mxu0 0.0
    %2196 = vmatprep.subr.mxu0 0.0
    %2197 = vmatpush2.msra.mxu0 0.0
    %2198 = vmatprep.subr.mxu0 0.0
    %2199 = vmatpush2.msra.mxu0 0.0
    %2200 = vmatprep.subr.mxu0 0.0
    %2201 = vmatpush2.msra.mxu0 0.0
    %2202 = vmatprep.subr.mxu0 0.0
    %2203 = vmatpush2.msra.mxu0 0.0
    %2204 = vmatprep.subr.mxu0 0.0
    %2205 = vmatpush2.msra.mxu0 0.0
    %2206 = vmatprep.subr.mxu0 0.0
    %2207 = vmatpush2.msra.mxu0 0.0
    %2208 = vmatprep.subr.mxu0 0.0
    %2209 = vmatpush2.msra.mxu0 0.0
    %2210 = vmatprep.subr.mxu0 0.0
    %2211 = vmatpush2.msra.mxu0 0.0
    %2212 = vmatprep.subr.mxu0 0.0
    %2213 = vmatpush2.msra.mxu0 0.0
    %2214 = vmatprep.subr.mxu0 0.0
    %2215 = vmatpush2.msra.mxu0 0.0
    %2216 = vmatprep.subr.mxu0 0.0
    %2217 = vmatpush2.msra.mxu0 0.0
    %2218 = vmatprep.subr.mxu0 0.0
    %2219 = vmatpush2.msra.mxu0 0.0
    %2220 = vmatprep.subr.mxu0 0.0
    %2221 = vmatpush2.msra.mxu0 0.0
    %2222 = vmatprep.subr.mxu0 0.0
    %2223 = vmatpush2.msra.mxu0 0.0
    %2224 = vmatprep.mubr.f32.mxu0 0.0
    %2225 = vmatmul.mubr.f32.gmra.mxu0 %v2017
    %v2226 = vpop.f32.mrf.mxu0
    %v2227 = vadd.f32 %v2157, %v2226
    %v2228 = vpop.f32.mrf.mxu0
    %2229 = vdwg.mxu0
    %v2230 = vld [vmem:[#allocation10 + $0x10] sm:$0xff]
    %v2232 = vsel %vm543, %v1932, 0
    %2234 = vmatprep.subr.mxu0 0.0
    %2235 = vmatpush1.msra.mxu0 0.0
    %2236 = vmatprep.subr.mxu0 0.0
    %2237 = vmatpush1.msra.mxu0 0.0
    %2238 = vmatprep.subr.mxu0 0.0
    %2239 = vmatpush1.msra.mxu0 0.0
    %2240 = vmatprep.subr.mxu0 0.0
    %2241 = vmatpush1.msra.mxu0 0.0
    %2242 = vmatprep.subr.mxu0 0.0
    %2243 = vmatpush1.msra.mxu0 0.0
    %2244 = vmatprep.subr.mxu0 0.0
    %2245 = vmatpush1.msra.mxu0 0.0
    %2246 = vmatprep.subr.mxu0 0.0
    %2247 = vmatpush1.msra.mxu0 0.0
    %2248 = vmatprep.subr.mxu0 0.0
    %2249 = vmatpush1.msra.mxu0 0.0
    %2250 = vmatprep.subr.mxu0 0.0
    %2251 = vmatpush1.msra.mxu0 0.0
    %2252 = vmatprep.subr.mxu0 0.0
    %2253 = vmatpush1.msra.mxu0 0.0
    %2254 = vmatprep.subr.mxu0 0.0
    %2255 = vmatpush1.msra.mxu0 0.0
    %2256 = vmatprep.subr.mxu0 0.0
    %2257 = vmatpush1.msra.mxu0 0.0
    %2258 = vmatprep.subr.mxu0 0.0
    %2259 = vmatpush1.msra.mxu0 0.0
    %2260 = vmatprep.subr.mxu0 0.0
    %2261 = vmatpush1.msra.mxu0 0.0
    %2262 = vmatprep.subr.mxu0 0.0
    %2263 = vmatpush1.msra.mxu0 0.0
    %2264 = vmatprep.subr.mxu0 0.0
    %2265 = vmatpush1.msra.mxu0 %v2230
    %2266 = vmatprep.subr.mxu0 0.0
    %2267 = vmatpush2.msra.mxu0 0.0
    %2268 = vmatprep.subr.mxu0 0.0
    %2269 = vmatpush2.msra.mxu0 0.0
    %2270 = vmatprep.subr.mxu0 0.0
    %2271 = vmatpush2.msra.mxu0 0.0
    %2272 = vmatprep.subr.mxu0 0.0
    %2273 = vmatpush2.msra.mxu0 0.0
    %2274 = vmatprep.subr.mxu0 0.0
    %2275 = vmatpush2.msra.mxu0 0.0
    %2276 = vmatprep.subr.mxu0 0.0
    %2277 = vmatpush2.msra.mxu0 0.0
    %2278 = vmatprep.subr.mxu0 0.0
    %2279 = vmatpush2.msra.mxu0 0.0
    %2280 = vmatprep.subr.mxu0 0.0
    %2281 = vmatpush2.msra.mxu0 0.0
    %2282 = vmatprep.subr.mxu0 0.0
    %2283 = vmatpush2.msra.mxu0 0.0
    %2284 = vmatprep.subr.mxu0 0.0
    %2285 = vmatpush2.msra.mxu0 0.0
    %2286 = vmatprep.subr.mxu0 0.0
    %2287 = vmatpush2.msra.mxu0 0.0
    %2288 = vmatprep.subr.mxu0 0.0
    %2289 = vmatpush2.msra.mxu0 0.0
    %2290 = vmatprep.subr.mxu0 0.0
    %2291 = vmatpush2.msra.mxu0 0.0
    %2292 = vmatprep.subr.mxu0 0.0
    %2293 = vmatpush2.msra.mxu0 0.0
    %2294 = vmatprep.subr.mxu0 0.0
    %2295 = vmatpush2.msra.mxu0 0.0
    %2296 = vmatprep.subr.mxu0 0.0
    %2297 = vmatpush2.msra.mxu0 0.0
    %2298 = vmatprep.mubr.f32.mxu0 0.0
    %2299 = vmatmul.mubr.f32.gmra.mxu0 %v2232
    %v2300 = vpop.f32.mrf.mxu0
    %v2301 = vadd.f32 0.0, %v2300
    %v2302 = vpop.f32.mrf.mxu0
    %2303 = vdwg.mxu0
    %v2304 = vadd.f32 %v2086, %v2301
    %v2305 = vld [vmem:[#allocation7 + $0x10] sm:$0xff]
    %2306 = vmatprep.subr.mxu0 0.0
    %2307 = vmatpush1.msra.mxu0 0.0
    %2308 = vmatprep.subr.mxu0 0.0
    %2309 = vmatpush1.msra.mxu0 0.0
    %2310 = vmatprep.subr.mxu0 0.0
    %2311 = vmatpush1.msra.mxu0 0.0
    %2312 = vmatprep.subr.mxu0 0.0
    %2313 = vmatpush1.msra.mxu0 0.0
    %2314 = vmatprep.subr.mxu0 0.0
    %2315 = vmatpush1.msra.mxu0 0.0
    %2316 = vmatprep.subr.mxu0 0.0
    %2317 = vmatpush1.msra.mxu0 0.0
    %2318 = vmatprep.subr.mxu0 0.0
    %2319 = vmatpush1.msra.mxu0 0.0
    %2320 = vmatprep.subr.mxu0 0.0
    %2321 = vmatpush1.msra.mxu0 0.0
    %2322 = vmatprep.subr.mxu0 0.0
    %2323 = vmatpush1.msra.mxu0 0.0
    %2324 = vmatprep.subr.mxu0 0.0
    %2325 = vmatpush1.msra.mxu0 0.0
    %2326 = vmatprep.subr.mxu0 0.0
    %2327 = vmatpush1.msra.mxu0 0.0
    %2328 = vmatprep.subr.mxu0 0.0
    %2329 = vmatpush1.msra.mxu0 0.0
    %2330 = vmatprep.subr.mxu0 0.0
    %2331 = vmatpush1.msra.mxu0 0.0
    %2332 = vmatprep.subr.mxu0 0.0
    %2333 = vmatpush1.msra.mxu0 0.0
    %2334 = vmatprep.subr.mxu0 0.0
    %2335 = vmatpush1.msra.mxu0 0.0
    %2336 = vmatprep.subr.mxu0 0.0
    %2337 = vmatpush1.msra.mxu0 %v2305
    %2338 = vmatprep.subr.mxu0 0.0
    %2339 = vmatpush2.msra.mxu0 0.0
    %2340 = vmatprep.subr.mxu0 0.0
    %2341 = vmatpush2.msra.mxu0 0.0
    %2342 = vmatprep.subr.mxu0 0.0
    %2343 = vmatpush2.msra.mxu0 0.0
    %2344 = vmatprep.subr.mxu0 0.0
    %2345 = vmatpush2.msra.mxu0 0.0
    %2346 = vmatprep.subr.mxu0 0.0
    %2347 = vmatpush2.msra.mxu0 0.0
    %2348 = vmatprep.subr.mxu0 0.0
    %2349 = vmatpush2.msra.mxu0 0.0
    %2350 = vmatprep.subr.mxu0 0.0
    %2351 = vmatpush2.msra.mxu0 0.0
    %2352 = vmatprep.subr.mxu0 0.0
    %2353 = vmatpush2.msra.mxu0 0.0
    %2354 = vmatprep.subr.mxu0 0.0
    %2355 = vmatpush2.msra.mxu0 0.0
    %2356 = vmatprep.subr.mxu0 0.0
    %2357 = vmatpush2.msra.mxu0 0.0
    %2358 = vmatprep.subr.mxu0 0.0
    %2359 = vmatpush2.msra.mxu0 0.0
    %2360 = vmatprep.subr.mxu0 0.0
    %2361 = vmatpush2.msra.mxu0 0.0
    %2362 = vmatprep.subr.mxu0 0.0
    %2363 = vmatpush2.msra.mxu0 0.0
    %2364 = vmatprep.subr.mxu0 0.0
    %2365 = vmatpush2.msra.mxu0 0.0
    %2366 = vmatprep.subr.mxu0 0.0
    %2367 = vmatpush2.msra.mxu0 0.0
    %2368 = vmatprep.subr.mxu0 0.0
    %2369 = vmatpush2.msra.mxu0 0.0
    %2370 = vmatprep.mubr.f32.mxu0 0.0
    %2371 = vmatmul.mubr.f32.gmra.mxu0 %v2232
    %v2372 = vpop.f32.mrf.mxu0
    %v2373 = vadd.f32 0.0, %v2372
    %v2374 = vpop.f32.mrf.mxu0
    %2375 = vdwg.mxu0
    %v2376 = vadd.f32 %v2227, %v2373
    %v2377 = vld [vmem:[#allocation10 + $0x18] sm:$0xff]
    %v2379 = vsel %vm543, %v1937, 0
    %2381 = vmatprep.subr.mxu0 0.0
    %2382 = vmatpush1.msra.mxu0 0.0
    %2383 = vmatprep.subr.mxu0 0.0
    %2384 = vmatpush1.msra.mxu0 0.0
    %2385 = vmatprep.subr.mxu0 0.0
    %2386 = vmatpush1.msra.mxu0 0.0
    %2387 = vmatprep.subr.mxu0 0.0
    %2388 = vmatpush1.msra.mxu0 0.0
    %2389 = vmatprep.subr.mxu0 0.0
    %2390 = vmatpush1.msra.mxu0 0.0
    %2391 = vmatprep.subr.mxu0 0.0
    %2392 = vmatpush1.msra.mxu0 0.0
    %2393 = vmatprep.subr.mxu0 0.0
    %2394 = vmatpush1.msra.mxu0 0.0
    %2395 = vmatprep.subr.mxu0 0.0
    %2396 = vmatpush1.msra.mxu0 0.0
    %2397 = vmatprep.subr.mxu0 0.0
    %2398 = vmatpush1.msra.mxu0 0.0
    %2399 = vmatprep.subr.mxu0 0.0
    %2400 = vmatpush1.msra.mxu0 0.0
    %2401 = vmatprep.subr.mxu0 0.0
    %2402 = vmatpush1.msra.mxu0 0.0
    %2403 = vmatprep.subr.mxu0 0.0
    %2404 = vmatpush1.msra.mxu0 0.0
    %2405 = vmatprep.subr.mxu0 0.0
    %2406 = vmatpush1.msra.mxu0 0.0
    %2407 = vmatprep.subr.mxu0 0.0
    %2408 = vmatpush1.msra.mxu0 0.0
    %2409 = vmatprep.subr.mxu0 0.0
    %2410 = vmatpush1.msra.mxu0 0.0
    %2411 = vmatprep.subr.mxu0 0.0
    %2412 = vmatpush1.msra.mxu0 %v2377
    %2413 = vmatprep.subr.mxu0 0.0
    %2414 = vmatpush2.msra.mxu0 0.0
    %2415 = vmatprep.subr.mxu0 0.0
    %2416 = vmatpush2.msra.mxu0 0.0
    %2417 = vmatprep.subr.mxu0 0.0
    %2418 = vmatpush2.msra.mxu0 0.0
    %2419 = vmatprep.subr.mxu0 0.0
    %2420 = vmatpush2.msra.mxu0 0.0
    %2421 = vmatprep.subr.mxu0 0.0
    %2422 = vmatpush2.msra.mxu0 0.0
    %2423 = vmatprep.subr.mxu0 0.0
    %2424 = vmatpush2.msra.mxu0 0.0
    %2425 = vmatprep.subr.mxu0 0.0
    %2426 = vmatpush2.msra.mxu0 0.0
    %2427 = vmatprep.subr.mxu0 0.0
    %2428 = vmatpush2.msra.mxu0 0.0
    %2429 = vmatprep.subr.mxu0 0.0
    %2430 = vmatpush2.msra.mxu0 0.0
    %2431 = vmatprep.subr.mxu0 0.0
    %2432 = vmatpush2.msra.mxu0 0.0
    %2433 = vmatprep.subr.mxu0 0.0
    %2434 = vmatpush2.msra.mxu0 0.0
    %2435 = vmatprep.subr.mxu0 0.0
    %2436 = vmatpush2.msra.mxu0 0.0
    %2437 = vmatprep.subr.mxu0 0.0
    %2438 = vmatpush2.msra.mxu0 0.0
    %2439 = vmatprep.subr.mxu0 0.0
    %2440 = vmatpush2.msra.mxu0 0.0
    %2441 = vmatprep.subr.mxu0 0.0
    %2442 = vmatpush2.msra.mxu0 0.0
    %2443 = vmatprep.subr.mxu0 0.0
    %2444 = vmatpush2.msra.mxu0 0.0
    %2445 = vmatprep.mubr.f32.mxu0 0.0
    %2446 = vmatmul.mubr.f32.gmra.mxu0 %v2379
    %v2447 = vpop.f32.mrf.mxu0
    %v2448 = vadd.f32 0.0, %v2447
    %v2449 = vpop.f32.mrf.mxu0
    %2450 = vdwg.mxu0
    %v2451 = vadd.f32 %v2304, %v2448
    %v2452 = vld [vmem:[#allocation7 + $0x18] sm:$0xff]
    %2453 = vmatprep.subr.mxu0 0.0
    %2454 = vmatpush1.msra.mxu0 0.0
    %2455 = vmatprep.subr.mxu0 0.0
    %2456 = vmatpush1.msra.mxu0 0.0
    %2457 = vmatprep.subr.mxu0 0.0
    %2458 = vmatpush1.msra.mxu0 0.0
    %2459 = vmatprep.subr.mxu0 0.0
    %2460 = vmatpush1.msra.mxu0 0.0
    %2461 = vmatprep.subr.mxu0 0.0
    %2462 = vmatpush1.msra.mxu0 0.0
    %2463 = vmatprep.subr.mxu0 0.0
    %2464 = vmatpush1.msra.mxu0 0.0
    %2465 = vmatprep.subr.mxu0 0.0
    %2466 = vmatpush1.msra.mxu0 0.0
    %2467 = vmatprep.subr.mxu0 0.0
    %2468 = vmatpush1.msra.mxu0 0.0
    %2469 = vmatprep.subr.mxu0 0.0
    %2470 = vmatpush1.msra.mxu0 0.0
    %2471 = vmatprep.subr.mxu0 0.0
    %2472 = vmatpush1.msra.mxu0 0.0
    %2473 = vmatprep.subr.mxu0 0.0
    %2474 = vmatpush1.msra.mxu0 0.0
    %2475 = vmatprep.subr.mxu0 0.0
    %2476 = vmatpush1.msra.mxu0 0.0
    %2477 = vmatprep.subr.mxu0 0.0
    %2478 = vmatpush1.msra.mxu0 0.0
    %2479 = vmatprep.subr.mxu0 0.0
    %2480 = vmatpush1.msra.mxu0 0.0
    %2481 = vmatprep.subr.mxu0 0.0
    %2482 = vmatpush1.msra.mxu0 0.0
    %2483 = vmatprep.subr.mxu0 0.0
    %2484 = vmatpush1.msra.mxu0 %v2452
    %2485 = vmatprep.subr.mxu0 0.0
    %2486 = vmatpush2.msra.mxu0 0.0
    %2487 = vmatprep.subr.mxu0 0.0
    %2488 = vmatpush2.msra.mxu0 0.0
    %2489 = vmatprep.subr.mxu0 0.0
    %2490 = vmatpush2.msra.mxu0 0.0
    %2491 = vmatprep.subr.mxu0 0.0
    %2492 = vmatpush2.msra.mxu0 0.0
    %2493 = vmatprep.subr.mxu0 0.0
    %2494 = vmatpush2.msra.mxu0 0.0
    %2495 = vmatprep.subr.mxu0 0.0
    %2496 = vmatpush2.msra.mxu0 0.0
    %2497 = vmatprep.subr.mxu0 0.0
    %2498 = vmatpush2.msra.mxu0 0.0
    %2499 = vmatprep.subr.mxu0 0.0
    %2500 = vmatpush2.msra.mxu0 0.0
    %2501 = vmatprep.subr.mxu0 0.0
    %2502 = vmatpush2.msra.mxu0 0.0
    %2503 = vmatprep.subr.mxu0 0.0
    %2504 = vmatpush2.msra.mxu0 0.0
    %2505 = vmatprep.subr.mxu0 0.0
    %2506 = vmatpush2.msra.mxu0 0.0
    %2507 = vmatprep.subr.mxu0 0.0
    %2508 = vmatpush2.msra.mxu0 0.0
    %2509 = vmatprep.subr.mxu0 0.0
    %2510 = vmatpush2.msra.mxu0 0.0
    %2511 = vmatprep.subr.mxu0 0.0
    %2512 = vmatpush2.msra.mxu0 0.0
    %2513 = vmatprep.subr.mxu0 0.0
    %2514 = vmatpush2.msra.mxu0 0.0
    %2515 = vmatprep.subr.mxu0 0.0
    %2516 = vmatpush2.msra.mxu0 0.0
    %2517 = vmatprep.mubr.f32.mxu0 0.0
    %2518 = vmatmul.mubr.f32.gmra.mxu0 %v2379
    %v2519 = vpop.f32.mrf.mxu0
    %v2520 = vadd.f32 0.0, %v2519
    %v2521 = vpop.f32.mrf.mxu0
    %2522 = vdwg.mxu0
    %v2523 = vadd.f32 %v2376, %v2520
    %v2524 = vld [vmem:[#allocation11] sm:$0x1]
    %v2526 = vlaneseq
    %v2527 = vshrl.u32 %v2526, 7
    %v2528 = vsub.s32 0, %v2527
    %v2529 = vrot.slane %v2524, %v2528
    %v2531 = vadd.f32 %v2451, %v2529
    %2532 = vst.msk [vmem:[#allocation14] sm:$0xff] %vm160, %v2531
    %v2533 = vld [vmem:[#allocation8] sm:$0x1]
    %v2535 = vlaneseq
    %v2536 = vshrl.u32 %v2535, 7
    %v2537 = vsub.s32 0, %v2536
    %v2538 = vrot.slane %v2533, %v2537
    %v2541 = vsel %vm543, %v154, 0
    %v2544 = vsel %vm543, %v155, 0
    %2546 = vmatprep.subr.mxu0 0.0
    %2547 = vmatpush1.msra.mxu0 0.0
    %2548 = vmatprep.subr.mxu0 0.0
    %2549 = vmatpush1.msra.mxu0 0.0
    %2550 = vmatprep.subr.mxu0 0.0
    %2551 = vmatpush1.msra.mxu0 0.0
    %2552 = vmatprep.subr.mxu0 0.0
    %2553 = vmatpush1.msra.mxu0 0.0
    %2554 = vmatprep.subr.mxu0 0.0
    %2555 = vmatpush1.msra.mxu0 0.0
    %2556 = vmatprep.subr.mxu0 0.0
    %2557 = vmatpush1.msra.mxu0 0.0
    %2558 = vmatprep.subr.mxu0 0.0
    %2559 = vmatpush1.msra.mxu0 0.0
    %2560 = vmatprep.subr.mxu0 0.0
    %2561 = vmatpush1.msra.mxu0 0.0
    %2562 = vmatprep.subr.mxu0 0.0
    %2563 = vmatpush1.msra.mxu0 0.0
    %2564 = vmatprep.subr.mxu0 0.0
    %2565 = vmatpush1.msra.mxu0 0.0
    %2566 = vmatprep.subr.mxu0 0.0
    %2567 = vmatpush1.msra.mxu0 0.0
    %2568 = vmatprep.subr.mxu0 0.0
    %2569 = vmatpush1.msra.mxu0 0.0
    %2570 = vmatprep.subr.mxu0 0.0
    %2571 = vmatpush1.msra.mxu0 0.0
    %2572 = vmatprep.subr.mxu0 0.0
    %2573 = vmatpush1.msra.mxu0 0.0
    %2574 = vmatprep.subr.mxu0 0.0
    %2575 = vmatpush1.msra.mxu0 0.0
    %2576 = vmatprep.subr.mxu0 0.0
    %2577 = vmatpush1.msra.mxu0 %v2523
    %2578 = vmatprep.subr.mxu0 0.0
    %2579 = vmatpush2.msra.mxu0 0.0
    %2580 = vmatprep.subr.mxu0 0.0
    %2581 = vmatpush2.msra.mxu0 0.0
    %2582 = vmatprep.subr.mxu0 0.0
    %2583 = vmatpush2.msra.mxu0 0.0
    %2584 = vmatprep.subr.mxu0 0.0
    %2585 = vmatpush2.msra.mxu0 0.0
    %2586 = vmatprep.subr.mxu0 0.0
    %2587 = vmatpush2.msra.mxu0 0.0
    %2588 = vmatprep.subr.mxu0 0.0
    %2589 = vmatpush2.msra.mxu0 0.0
    %2590 = vmatprep.subr.mxu0 0.0
    %2591 = vmatpush2.msra.mxu0 0.0
    %2592 = vmatprep.subr.mxu0 0.0
    %2593 = vmatpush2.msra.mxu0 0.0
    %2594 = vmatprep.subr.mxu0 0.0
    %2595 = vmatpush2.msra.mxu0 0.0
    %2596 = vmatprep.subr.mxu0 0.0
    %2597 = vmatpush2.msra.mxu0 0.0
    %2598 = vmatprep.subr.mxu0 0.0
    %2599 = vmatpush2.msra.mxu0 0.0
    %2600 = vmatprep.subr.mxu0 0.0
    %2601 = vmatpush2.msra.mxu0 0.0
    %2602 = vmatprep.subr.mxu0 0.0
    %2603 = vmatpush2.msra.mxu0 0.0
    %2604 = vmatprep.subr.mxu0 0.0
    %2605 = vmatpush2.msra.mxu0 0.0
    %2606 = vmatprep.subr.mxu0 0.0
    %2607 = vmatpush2.msra.mxu0 0.0
    %2608 = vmatprep.subr.mxu0 0.0
    %2609 = vmatpush2.msra.mxu0 0.0
    %2610 = vmatprep.mubr.f32.mxu0 0.0
    %2611 = vmatmul.mubr.f32.gmra.mxu0 %v2541
    %v2612 = vpop.f32.mrf.mxu0
    %v2613 = vadd.f32 %v2538, %v2612
    %v2614 = vpop.f32.mrf.mxu0
    %2615 = vmatprep.mubr.f32.mxu0 0.0
    %2616 = vmatmul.mubr.f32.gmra.mxu0 %v2544
    %v2617 = vpop.f32.mrf.mxu0
    %v2618 = vadd.f32 %v2538, %v2617
    %v2619 = vpop.f32.mrf.mxu0
    %2620 = vdwg.mxu0
    %2621 = vst.msk [vmem:[#allocation13] sm:$0xff] %vm160, %v2613
    %2622 = vst.msk [vmem:[#allocation13 + $0x8] sm:$0xff] %vm160, %v2618
    // Predicated region
    $region74: #{multi_head_relational_attention.1} parent=1 // pred_check
      _
    $region75: #{multi_head_relational_attention.1} parent=1 // pred_check_branch
      %2624 = sbr.rel (0) target = $region77
    $region76: #{multi_head_relational_attention.1} parent=1 // pred_region
      %s2626 = ssub.s32 256, 256
      %2627 = vsyncadd [#allocation4], %s2626
      %s2628 = sshll.u32 [#allocation13], 4
      %s2629 = int_to_ptr.vmem [resolvable:$true] %s2628
      %2634 = dma.vmem_to_hbm [thread:$0]  %s2629, 256, %s12, [#allocation4], 128, 128, 8
    $region77: #{multi_head_relational_attention.1} parent=1 // pred_fallthru
      _
    // Predicated region
    $region78: #{multi_head_relational_attention.1} parent=1 // pred_check
      _
    $region79: #{multi_head_relational_attention.1} parent=1 // pred_check_branch
      %2636 = sbr.rel (0) target = $region81
    $region80: #{multi_head_relational_attention.1} parent=1 // pred_region
      %s2638 = ssub.s32 128, 128
      %2639 = vsyncadd [#allocation15], %s2638
      %s2641 = sshll.u32 [#allocation14], 4
      %s2642 = int_to_ptr.vmem [resolvable:$true] %s2641
      %2644 = dma.vmem_to_hbm [thread:$0]  %s2642, 128, %s13, [#allocation15]
    $region81: #{multi_head_relational_attention.1} parent=1 // pred_fallthru
      _
    // Predicated region
    $region82: #{multi_head_relational_attention.1} parent=1 // pred_check
      _
    $region83: #{multi_head_relational_attention.1} parent=1 // pred_check_branch
      %2646 = sbr.rel (0) target = $region85
    $region84: #{multi_head_relational_attention.1} parent=1 // pred_region
      %2647 = dma.done [#allocation4], 256
    $region85: #{multi_head_relational_attention.1} parent=1 // pred_fallthru
      _
    // Predicated region
    $region86: #{multi_head_relational_attention.1} parent=1 // pred_check
      _
    $region87: #{multi_head_relational_attention.1} parent=1 // pred_check_branch
      %2649 = sbr.rel (0) target = $region89
    $region88: #{multi_head_relational_attention.1} parent=1 // pred_region
      %2650 = dma.done [#allocation15], 128
    $region89: #{multi_head_relational_attention.1} parent=1 // pred_fallthru
      _
    %2651 = vsyncpa [#allocation3], 1
    %2652 = vsyncpa [#allocation6], 1
    %2653 = vsyncpa [#allocation9], 1
    %2654 = vsyncpa [#allocation12], 1
    %2655 = vsyncpa [#allocation4], 1
    %2656 = vsyncpa [#allocation15], 1

</llo_original>
